<compile_context>
chip_gen: v6e
topology: v6e:2x2x1
jax: 0.10.0
libtpu: 0.0.40
codegen_flags: <defaults>
</compile_context>

<pallas_src>
import jax
import jax.numpy as jnp
import numpy as np
from jax.experimental import pallas as pl
from jax.experimental.pallas import tpu as pltpu


def decoder_kernel(x_ref, h0_ref, c0_ref, enc_ref,
                   wh_ref, wf_ref, wch_ref, wcc_ref,
                   wiht_ref, whht_ref, b_ref, woutt_ref,
                   out_ref, newh_ref, cellf_ref, prob_ref,
                   gx_ref, hseq_ref):
    """Full Decoder.forward for one batch block (all VMEM resident).

    Shapes (Bb = batch block, padded to a multiple of 8):
      x_ref     (T, Bb, I)   decoder inputs (f32)
      h0_ref    (Bb, H)      initial hidden state
      c0_ref    (Bb, H)      initial cell state
      enc_ref   (F, Bb, H)   encoder output
      wh_ref    (1, H)       wh.weight
      wf_ref    (1, H)       wf.weight
      wch_ref   (H, H)       wc.weight[:, :H].T   (applied to h0)
      wcc_ref   (H, H)       wc.weight[:, H:].T   (applied to context)
      wiht_ref  (I, 4H)      lstm.weight_ih_l0.T, gate cols (i,f,o,g), bf16
      whht_ref  (H, 4H)      lstm.weight_hh_l0.T, gate cols (i,f,o,g), f32
      b_ref     (1, 4H)      bias_ih + bias_hh, gate cols (i,f,o,g)
      woutt_ref (H, Opad)    wout.weight.T padded to 128-lane multiple, bf16
      out_ref   (T, Bb, H)   LSTM outputs
      newh_ref  (Bb, H)      attention-updated hidden state
      cellf_ref (Bb, H)      final LSTM cell state
      prob_ref  (T, Bb, Opad) wout(output), lane-padded
      gx_ref    (T*Bb, 4H)   scratch: hoisted x @ W_ih + b
      hseq_ref  (T*Bb, H)    scratch: per-step hidden states
    """
    T, Bb, H = out_ref.shape
    I = x_ref.shape[-1]
    H3 = 3 * H
    Opad = prob_ref.shape[-1]

    h0 = h0_ref[...]                     # (Bb, H)
    enc = enc_ref[...]                   # (F, Bb, H)

    # --- attention: alphas = softmax_dim0(tanh(wh(h0_expanded) + wf(enc))) ----
    eh = jnp.sum(h0 * wh_ref[...], axis=-1, keepdims=True)                # (Bb, 1)
    ef = jnp.sum(enc * wf_ref[...][None, :, :], axis=-1, keepdims=True)   # (F, Bb, 1)
    e = jnp.tanh(eh[None, :, :] + ef)                                     # (F, Bb, 1)
    m = jnp.max(e, axis=0, keepdims=True)
    p = jnp.exp(e - m)
    alphas = p / jnp.sum(p, axis=0, keepdims=True)                        # (F, Bb, 1)

    c_att = jnp.sum(alphas * enc, axis=0)                                 # (Bb, H)

    # new_h = tanh(wc(cat(h0, c))) -- split matmul, weights pre-transposed (f32)
    new_h = jnp.tanh(
        jnp.dot(h0, wch_ref[...], preferred_element_type=jnp.float32)
        + jnp.dot(c_att, wcc_ref[...], preferred_element_type=jnp.float32))
    newh_ref[...] = new_h

    # --- hoisted input projection: one (T*Bb, I) x (I, 4H) matmul (bf16 in, f32 acc)
    x2d = x_ref[...].reshape(T * Bb, I).astype(jnp.bfloat16)
    gx_ref[...] = (jnp.dot(x2d, wiht_ref[...],
                           preferred_element_type=jnp.float32)
                   + b_ref[...])                                          # (T*Bb, 4H)

    w_hh_t = whht_ref[...]                                                # (H, 4H) f32

    # --- LSTM recurrence, gate order (i, f, o, g): sigmoid on [:3H], tanh on [3H:]
    def step(t, carry):
        h, c = carry
        row = pl.multiple_of(t * Bb, Bb)
        gates = gx_ref[pl.ds(row, Bb), :] + jnp.dot(
            h, w_hh_t, preferred_element_type=jnp.float32)                # (Bb, 4H)
        sig = jax.nn.sigmoid(gates[:, :H3])       # i | f | o lanes
        g_g = jnp.tanh(gates[:, H3:])             # g lanes
        i_g = sig[:, 0:H]
        f_g = sig[:, H:2 * H]
        o_g = sig[:, 2 * H:H3]
        c = f_g * c + i_g * g_g
        h = o_g * jnp.tanh(c)
        hseq_ref[pl.ds(row, Bb), :] = h           # aligned, off critical path
        return (h, c)

    _, c_final = jax.lax.fori_loop(0, T, step, (new_h, c0_ref[...]),
                                   unroll=min(T, 8))
    cellf_ref[...] = c_final

    # (T*Bb, H) -> (T, Bb, H) is layout-free (Bb is a multiple of 8 sublanes)
    out_ref[...] = hseq_ref[...].reshape(T, Bb, H)

    # --- hoisted output projection: one (T*Bb, H) x (H, Opad) matmul (bf16 in, f32 acc)
    outs_bf16 = hseq_ref[...].astype(jnp.bfloat16)
    prob_ref[...] = jnp.dot(outs_bf16, woutt_ref[...],
                            preferred_element_type=jnp.float32).reshape(T, Bb, Opad)


def _round_up(n, m):
    return (n + m - 1) // m * m


def _permute_gates(w, H):
    """Column-permute PyTorch gate order (i, f, g, o) -> (i, f, o, g)."""
    return jnp.concatenate(
        [w[..., :2 * H], w[..., 3 * H:4 * H], w[..., 2 * H:3 * H]], axis=-1)


def decoder_forward(x, h0, c0, enc, params, *, batch_block=8):
    """Pallas wrapper mirroring Decoder.forward.

    Returns (output, (new_h, cell_states), probability) with the same shapes and
    semantics as the PyTorch module (num_layers dim of 1 preserved).
    """
    T, B, I = x.shape
    H = h0.shape[-1]
    O = params["wout"].shape[0]
    F = enc.shape[0]

    # Batch padded to a multiple of 8 sublanes; one grid step per batch block.
    Bb = max(8, _round_up(batch_block, 8))
    B_pad = _round_up(B, Bb)
    G = B_pad // Bb
    # wout N dim padded to 128 lanes -> lane-dense prob matmul + stores.
    O_pad = _round_up(O, 128)

    def pad_batch(a, axis):
        if B_pad == B:
            return a
        widths = [(0, 0)] * a.ndim
        widths[axis] = (0, B_pad - B)
        return jnp.pad(a, widths)

    x_p = pad_batch(x, 1)            # (T, B_pad, I)
    h0_p = pad_batch(h0[0], 0)       # (B_pad, H)
    c0_p = pad_batch(c0[0], 0)       # (B_pad, H)
    enc_p = pad_batch(enc, 1)        # (F, B_pad, H)

    # Weight prep (trace-time, one-off): transpose, split wc, permute gate columns,
    # fold biases, pad + bf16-cast the MXU operands of the two hoisted matmuls.
    wc = params["wc"]
    wc_h_t = wc[:, :H].T                                        # (H, H)
    wc_c_t = wc[:, H:].T                                        # (H, H)
    w_ih_t = _permute_gates(params["w_ih"].T, H).astype(jnp.bfloat16)   # (I, 4H) bf16
    w_hh_t = _permute_gates(params["w_hh"].T, H)                         # (H, 4H) f32
    b = _permute_gates(params["b_ih"] + params["b_hh"], H).reshape(1, 4 * H)
    wout_t = jnp.pad(params["wout"].T, ((0, 0), (0, O_pad - O))).astype(jnp.bfloat16)

    full2 = lambda shape: pl.BlockSpec(shape, lambda g: (0, 0))
    in_specs = [
        pl.BlockSpec((T, Bb, I), lambda g: (0, g, 0)),   # x
        pl.BlockSpec((Bb, H), lambda g: (g, 0)),         # h0
        pl.BlockSpec((Bb, H), lambda g: (g, 0)),         # c0
        pl.BlockSpec((F, Bb, H), lambda g: (0, g, 0)),   # enc
        full2((1, H)),                                   # wh
        full2((1, H)),                                   # wf
        full2((H, H)),                                   # wc[:, :H].T
        full2((H, H)),                                   # wc[:, H:].T
        full2((I, 4 * H)),                               # w_ih.T (bf16)
        full2((H, 4 * H)),                               # w_hh.T (f32)
        full2((1, 4 * H)),                               # bias
        full2((H, O_pad)),                               # wout.T padded (bf16)
    ]
    out_specs = (
        pl.BlockSpec((T, Bb, H), lambda g: (0, g, 0)),       # output
        pl.BlockSpec((Bb, H), lambda g: (g, 0)),             # new_h
        pl.BlockSpec((Bb, H), lambda g: (g, 0)),             # final cell state
        pl.BlockSpec((T, Bb, O_pad), lambda g: (0, g, 0)),   # probability (lane-padded)
    )
    out_shapes = (
        jax.ShapeDtypeStruct((T, B_pad, H), jnp.float32),
        jax.ShapeDtypeStruct((B_pad, H), jnp.float32),
        jax.ShapeDtypeStruct((B_pad, H), jnp.float32),
        jax.ShapeDtypeStruct((T, B_pad, O_pad), jnp.float32),
    )
    scratch_shapes = [
        pltpu.VMEM((T * Bb, 4 * H), jnp.float32),   # gates_x
        pltpu.VMEM((T * Bb, H), jnp.float32),       # hidden-state sequence
    ]

    out_p, new_h, cell_f, prob_p = pl.pallas_call(
        decoder_kernel,
        out_shape=out_shapes,
        grid=(G,),
        in_specs=in_specs,
        out_specs=out_specs,
        scratch_shapes=scratch_shapes,
        compiler_params=pltpu.CompilerParams(
            dimension_semantics=("parallel",),          # batch blocks -> 2nd TC on v7x
            vmem_limit_bytes=32 * 1024 * 1024,          # explicit scoped-VMEM ceiling
        ),
    )(x_p, h0_p, c0_p, enc_p,
      params["wh"], params["wf"], wc_h_t, wc_c_t,
      w_ih_t, w_hh_t, b, wout_t)

    # Slice away batch / lane padding for free in XLA.
    return (out_p[:, :B, :],
            (new_h[:B][None], cell_f[:B][None]),
            prob_p[:, :B, :O])


def decoder_ref(x, h0, c0, enc, params):
    """Pure-JAX f32 reference matching the PyTorch forward (for verification)."""
    H = h0.shape[-1]
    wh_w, wf_w, wc_w = params["wh"], params["wf"], params["wc"]
    eh = jnp.sum(h0 * wh_w, axis=-1, keepdims=True)         # (1, B, 1)
    ef = jnp.sum(enc * wf_w, axis=-1, keepdims=True)        # (F, B, 1)
    alphas = jax.nn.softmax(jnp.tanh(eh + ef), axis=0)
    c_att = jnp.sum(alphas * enc, axis=0, keepdims=True)    # (1, B, H)
    new_h = jnp.tanh(jnp.concatenate([h0, c_att], -1) @ wc_w.T)  # (1, B, H)

    w_ih, w_hh = params["w_ih"], params["w_hh"]
    b = params["b_ih"] + params["b_hh"]

    def step(carry, x_t):
        h, c = carry
        gates = x_t @ w_ih.T + h @ w_hh.T + b
        i = jax.nn.sigmoid(gates[:, :H])
        f = jax.nn.sigmoid(gates[:, H:2 * H])
        g = jnp.tanh(gates[:, 2 * H:3 * H])
        o = jax.nn.sigmoid(gates[:, 3 * H:])
        c = f * c + i * g
        h = o * jnp.tanh(c)
        return (h, c), h

    (_, cT), outs = jax.lax.scan(step, (new_h[0], c0[0]), x)
    prob = outs @ params["wout"].T
    return outs, (new_h, cT[None]), prob


if __name__ == "__main__":
    # T=seq_len, B=batch, I=input_size, H=hidden_size, O=output_size, F=num_features
    T, B, I, H, O, F = 8, 4, 16, 32, 16, 8

    key = jax.random.PRNGKey(0)
    ks = jax.random.split(key, 12)
    scale = 0.1

    x = jax.random.normal(ks[0], (T, B, I), jnp.float32)
    h0 = jax.random.normal(ks[1], (1, B, H), jnp.float32)
    c0 = jax.random.normal(ks[2], (1, B, H), jnp.float32)
    enc = jax.random.normal(ks[3], (F, B, H), jnp.float32)

    params = dict(
        wh=jax.random.normal(ks[4], (1, H), jnp.float32) * scale,
        wf=jax.random.normal(ks[5], (1, H), jnp.float32) * scale,
        wc=jax.random.normal(ks[6], (H, 2 * H), jnp.float32) * scale,
        w_ih=jax.random.normal(ks[7], (4 * H, I), jnp.float32) * scale,
        w_hh=jax.random.normal(ks[8], (4 * H, H), jnp.float32) * scale,
        b_ih=jax.random.normal(ks[9], (4 * H,), jnp.float32) * scale,
        b_hh=jax.random.normal(ks[10], (4 * H,), jnp.float32) * scale,
        wout=jax.random.normal(ks[11], (O, H), jnp.float32) * scale,
    )

    out, (new_h, cell_f), prob = decoder_forward(x, h0, c0, enc, params)
    jax.block_until_ready((out, new_h, cell_f, prob))

    r_out, (r_nh, r_cf), r_prob = decoder_ref(x, h0, c0, enc, params)
    # Tolerance widened vs. pure-f32 because the two hoisted matmuls take bf16
    # MXU operands (f32 accumulation); recurrence / attention math stays f32.
    tol = dict(atol=2e-2, rtol=2e-2)
    assert np.allclose(np.asarray(out), np.asarray(r_out), **tol)
    assert np.allclose(np.asarray(new_h), np.asarray(r_nh), atol=1e-4, rtol=1e-4)
    assert np.allclose(np.asarray(cell_f), np.asarray(r_cf), **tol)
    assert np.allclose(np.asarray(prob), np.asarray(r_prob), **tol)

    print("KERNEL_OK")
</pallas_src>

<mosaic_0001>
module attributes {stable_mosaic.version = 11 : i64} {
  func.func @decoder_kernel(%arg0: i32, %arg1: memref<8x8x16xf32, #tpu.memory_space<vmem>>, %arg2: memref<8x32xf32, #tpu.memory_space<vmem>>, %arg3: memref<8x32xf32, #tpu.memory_space<vmem>>, %arg4: memref<8x8x32xf32, #tpu.memory_space<vmem>>, %arg5: memref<1x32xf32, #tpu.memory_space<vmem>>, %arg6: memref<1x32xf32, #tpu.memory_space<vmem>>, %arg7: memref<32x32xf32, #tpu.memory_space<vmem>>, %arg8: memref<32x32xf32, #tpu.memory_space<vmem>>, %arg9: memref<16x128xbf16, #tpu.memory_space<vmem>>, %arg10: memref<32x128xf32, #tpu.memory_space<vmem>>, %arg11: memref<1x128xf32, #tpu.memory_space<vmem>>, %arg12: memref<32x128xbf16, #tpu.memory_space<vmem>>, %arg13: memref<8x8x32xf32, #tpu.memory_space<vmem>>, %arg14: memref<8x32xf32, #tpu.memory_space<vmem>>, %arg15: memref<8x32xf32, #tpu.memory_space<vmem>>, %arg16: memref<8x8x128xf32, #tpu.memory_space<vmem>>, %arg17: memref<64x128xf32, #tpu.memory_space<vmem>>, %arg18: memref<64x32xf32, #tpu.memory_space<vmem>>) attributes {dimension_semantics = [#tpu.dimension_semantics<parallel>], iteration_bounds = array<i64: 1>, scalar_prefetch = 0 : i64, scratch_operands = 2 : i64, tpu.core_type = #tpu.core_type<tc>, window_params = [{transform_indices = @transform_0, window_bounds = array<i64: 8, 8, 16>}, {transform_indices = @transform_1, window_bounds = array<i64: 8, 32>}, {transform_indices = @transform_2, window_bounds = array<i64: 8, 32>}, {transform_indices = @transform_3, window_bounds = array<i64: 8, 8, 32>}, {pipeline_mode = #tpu.pipeline_mode<synchronous>, transform_indices = @transform_4, window_bounds = array<i64: 1, 32>}, {pipeline_mode = #tpu.pipeline_mode<synchronous>, transform_indices = @transform_5, window_bounds = array<i64: 1, 32>}, {pipeline_mode = #tpu.pipeline_mode<synchronous>, transform_indices = @transform_6, window_bounds = array<i64: 32, 32>}, {pipeline_mode = #tpu.pipeline_mode<synchronous>, transform_indices = @transform_7, window_bounds = array<i64: 32, 32>}, {pipeline_mode = #tpu.pipeline_mode<synchronous>, transform_indices = @transform_8, window_bounds = array<i64: 16, 128>}, {pipeline_mode = #tpu.pipeline_mode<synchronous>, transform_indices = @transform_9, window_bounds = array<i64: 32, 128>}, {pipeline_mode = #tpu.pipeline_mode<synchronous>, transform_indices = @transform_10, window_bounds = array<i64: 1, 128>}, {pipeline_mode = #tpu.pipeline_mode<synchronous>, transform_indices = @transform_11, window_bounds = array<i64: 32, 128>}, {transform_indices = @transform_12, window_bounds = array<i64: 8, 8, 32>}, {transform_indices = @transform_13, window_bounds = array<i64: 8, 32>}, {transform_indices = @transform_14, window_bounds = array<i64: 8, 32>}, {transform_indices = @transform_15, window_bounds = array<i64: 8, 8, 128>}]} {
    %c0 = arith.constant 0 : index
    %c0_0 = arith.constant 0 : index
    %0 = vector.load %arg2[%c0, %c0_0] : memref<8x32xf32, #tpu.memory_space<vmem>>, vector<8x32xf32>
    %c0_1 = arith.constant 0 : index
    %c0_2 = arith.constant 0 : index
    %c0_3 = arith.constant 0 : index
    %1 = vector.load %arg4[%c0_1, %c0_2, %c0_3] : memref<8x8x32xf32, #tpu.memory_space<vmem>>, vector<8x8x32xf32>
    %c0_4 = arith.constant 0 : index
    %c0_5 = arith.constant 0 : index
    %2 = vector.load %arg5[%c0_4, %c0_5] : memref<1x32xf32, #tpu.memory_space<vmem>>, vector<1x32xf32>
    %3 = vector.broadcast %2 : vector<1x32xf32> to vector<8x32xf32>
    %4 = arith.mulf %0, %3 : vector<8x32xf32>
    %cst = arith.constant dense<0.000000e+00> : vector<8xf32>
    %5 = vector.multi_reduction <add>, %4, %cst [1] : vector<8x32xf32> to vector<8xf32>
    %6 = vector.shape_cast %5 : vector<8xf32> to vector<8x1xf32>
    %c0_6 = arith.constant 0 : index
    %c0_7 = arith.constant 0 : index
    %7 = vector.load %arg6[%c0_6, %c0_7] : memref<1x32xf32, #tpu.memory_space<vmem>>, vector<1x32xf32>
    %8 = vector.shape_cast %7 : vector<1x32xf32> to vector<1x1x32xf32>
    %9 = vector.broadcast %8 : vector<1x1x32xf32> to vector<8x8x32xf32>
    %10 = arith.mulf %1, %9 : vector<8x8x32xf32>
    %cst_8 = arith.constant dense<0.000000e+00> : vector<8x8xf32>
    %11 = vector.multi_reduction <add>, %10, %cst_8 [2] : vector<8x8x32xf32> to vector<8x8xf32>
    %12 = vector.shape_cast %11 : vector<8x8xf32> to vector<8x8x1xf32>
    %13 = vector.shape_cast %6 : vector<8x1xf32> to vector<1x8x1xf32>
    %14 = vector.broadcast %13 : vector<1x8x1xf32> to vector<8x8x1xf32>
    %15 = arith.addf %14, %12 : vector<8x8x1xf32>
    %16 = math.tanh %15 : vector<8x8x1xf32>
    %cst_9 = arith.constant dense<0xFF800000> : vector<8x1xf32>
    %17 = vector.multi_reduction <maximumf>, %16, %cst_9 [0] : vector<8x8x1xf32> to vector<8x1xf32>
    %18 = vector.shape_cast %17 : vector<8x1xf32> to vector<1x8x1xf32>
    %19 = vector.broadcast %18 : vector<1x8x1xf32> to vector<8x8x1xf32>
    %20 = arith.subf %16, %19 : vector<8x8x1xf32>
    %21 = math.exp %20 : vector<8x8x1xf32>
    %cst_10 = arith.constant dense<0.000000e+00> : vector<8x1xf32>
    %22 = vector.multi_reduction <add>, %21, %cst_10 [0] : vector<8x8x1xf32> to vector<8x1xf32>
    %23 = vector.shape_cast %22 : vector<8x1xf32> to vector<1x8x1xf32>
    %24 = vector.broadcast %23 : vector<1x8x1xf32> to vector<8x8x1xf32>
    %25 = arith.divf %21, %24 : vector<8x8x1xf32>
    %26 = vector.broadcast %25 : vector<8x8x1xf32> to vector<8x8x32xf32>
    %27 = arith.mulf %26, %1 : vector<8x8x32xf32>
    %cst_11 = arith.constant dense<0.000000e+00> : vector<8x32xf32>
    %28 = vector.multi_reduction <add>, %27, %cst_11 [0] : vector<8x8x32xf32> to vector<8x32xf32>
    %c0_12 = arith.constant 0 : index
    %c0_13 = arith.constant 0 : index
    %29 = vector.load %arg7[%c0_12, %c0_13] : memref<32x32xf32, #tpu.memory_space<vmem>>, vector<32x32xf32>
    %cst_14 = arith.constant dense<0.000000e+00> : vector<8x32xf32>
    %30 = tpu.matmul %0, %29, %cst_14 {dimension_numbers = #tpu.dot_dimension_numbers<[1], [0], [0], [1], [0, 0, 1, 1], [], []>} : vector<8x32xf32>, vector<32x32xf32>, vector<8x32xf32> -> vector<8x32xf32>
    %c0_15 = arith.constant 0 : index
    %c0_16 = arith.constant 0 : index
    %31 = vector.load %arg8[%c0_15, %c0_16] : memref<32x32xf32, #tpu.memory_space<vmem>>, vector<32x32xf32>
    %cst_17 = arith.constant dense<0.000000e+00> : vector<8x32xf32>
    %32 = tpu.matmul %28, %31, %cst_17 {dimension_numbers = #tpu.dot_dimension_numbers<[1], [0], [0], [1], [0, 0, 1, 1], [], []>} : vector<8x32xf32>, vector<32x32xf32>, vector<8x32xf32> -> vector<8x32xf32>
    %33 = arith.addf %30, %32 : vector<8x32xf32>
    %34 = math.tanh %33 : vector<8x32xf32>
    %c0_18 = arith.constant 0 : index
    %c0_19 = arith.constant 0 : index
    %35 = vector.load %arg14[%c0_18, %c0_19] : memref<8x32xf32, #tpu.memory_space<vmem>>, vector<8x32xf32>
    tpu.vector_store %arg14[%c0_18, %c0_19], %34 {strides = array<i32>} : memref<8x32xf32, #tpu.memory_space<vmem>>, vector<8x32xf32>,
    %c0_20 = arith.constant 0 : index
    %c0_21 = arith.constant 0 : index
    %c0_22 = arith.constant 0 : index
    %36 = vector.load %arg1[%c0_20, %c0_21, %c0_22] : memref<8x8x16xf32, #tpu.memory_space<vmem>>, vector<8x8x16xf32>
    %37 = vector.shape_cast %36 : vector<8x8x16xf32> to vector<64x16xf32>
    %38 = arith.truncf %37 : vector<64x16xf32> to vector<64x16xbf16>
    %c0_23 = arith.constant 0 : index
    %c0_24 = arith.constant 0 : index
    %39 = vector.load %arg9[%c0_23, %c0_24] : memref<16x128xbf16, #tpu.memory_space<vmem>>, vector<16x128xbf16>
    %cst_25 = arith.constant dense<0.000000e+00> : vector<64x128xf32>
    %40 = tpu.matmul %38, %39, %cst_25 {dimension_numbers = #tpu.dot_dimension_numbers<[1], [0], [0], [1], [0, 0, 1, 1], [], []>} : vector<64x16xbf16>, vector<16x128xbf16>, vector<64x128xf32> -> vector<64x128xf32>
    %c0_26 = arith.constant 0 : index
    %c0_27 = arith.constant 0 : index
    %41 = vector.load %arg11[%c0_26, %c0_27] : memref<1x128xf32, #tpu.memory_space<vmem>>, vector<1x128xf32>
    %42 = vector.broadcast %41 : vector<1x128xf32> to vector<64x128xf32>
    %43 = arith.addf %40, %42 : vector<64x128xf32>
    %c0_28 = arith.constant 0 : index
    %c0_29 = arith.constant 0 : index
    %44 = vector.load %arg17[%c0_28, %c0_29] : memref<64x128xf32, #tpu.memory_space<vmem>>, vector<64x128xf32>
    tpu.vector_store %arg17[%c0_28, %c0_29], %43 {strides = array<i32>} : memref<64x128xf32, #tpu.memory_space<vmem>>, vector<64x128xf32>,
    %c0_30 = arith.constant 0 : index
    %c0_31 = arith.constant 0 : index
    %45 = vector.load %arg10[%c0_30, %c0_31] : memref<32x128xf32, #tpu.memory_space<vmem>>, vector<32x128xf32>
    %c0_32 = arith.constant 0 : index
    %c0_33 = arith.constant 0 : index
    %46 = vector.load %arg3[%c0_32, %c0_33] : memref<8x32xf32, #tpu.memory_space<vmem>>, vector<8x32xf32>
    %c0_i32 = arith.constant 0 : i32
    %c8_i32 = arith.constant 8 : i32
    %47 = arith.muli %c0_i32, %c8_i32 : i32
    %48 = tpu.assume_multiple %47, 8 : i32
    %49 = arith.index_cast %48 : i32 to index
    %c0_34 = arith.constant 0 : index
    %50 = vector.load %arg17[%49, %c0_34] : memref<64x128xf32, #tpu.memory_space<vmem>>, vector<8x128xf32>
    %cst_35 = arith.constant dense<0.000000e+00> : vector<8x128xf32>
    %51 = tpu.matmul %34, %45, %cst_35 {dimension_numbers = #tpu.dot_dimension_numbers<[1], [0], [0], [1], [0, 0, 1, 1], [], []>} : vector<8x32xf32>, vector<32x128xf32>, vector<8x128xf32> -> vector<8x128xf32>
    %52 = arith.addf %50, %51 : vector<8x128xf32>
    %53 = vector.extract_strided_slice %52 {offsets = [0, 0], sizes = [8, 96], strides = [1, 1]} : vector<8x128xf32> to vector<8x96xf32>
    %54 = arith.negf %53 : vector<8x96xf32>
    %55 = math.exp %54 : vector<8x96xf32>
    %cst_36 = arith.constant 1.000000e+00 : f32
    %56 = vector.broadcast %cst_36 : f32 to vector<8x96xf32>
    %57 = arith.addf %56, %55 : vector<8x96xf32>
    %58 = arith.divf %56, %57 : vector<8x96xf32>
    %59 = vector.extract_strided_slice %52 {offsets = [0, 96], sizes = [8, 32], strides = [1, 1]} : vector<8x128xf32> to vector<8x32xf32>
    %60 = math.tanh %59 : vector<8x32xf32>
    %61 = vector.extract_strided_slice %58 {offsets = [0, 0], sizes = [8, 32], strides = [1, 1]} : vector<8x96xf32> to vector<8x32xf32>
    %62 = vector.extract_strided_slice %58 {offsets = [0, 32], sizes = [8, 32], strides = [1, 1]} : vector<8x96xf32> to vector<8x32xf32>
    %63 = vector.extract_strided_slice %58 {offsets = [0, 64], sizes = [8, 32], strides = [1, 1]} : vector<8x96xf32> to vector<8x32xf32>
    %64 = arith.mulf %62, %46 : vector<8x32xf32>
    %65 = arith.mulf %61, %60 : vector<8x32xf32>
    %66 = arith.addf %64, %65 : vector<8x32xf32>
    %67 = math.tanh %66 : vector<8x32xf32>
    %68 = arith.mulf %63, %67 : vector<8x32xf32>
    %69 = arith.index_cast %48 : i32 to index
    %c0_37 = arith.constant 0 : index
    %70 = vector.load %arg18[%69, %c0_37] : memref<64x32xf32, #tpu.memory_space<vmem>>, vector<8x32xf32>
    tpu.vector_store %arg18[%69, %c0_37], %68 {strides = array<i32>} : memref<64x32xf32, #tpu.memory_space<vmem>>, vector<8x32xf32>,
    %c1_i32 = arith.constant 1 : i32
    %c8_i32_38 = arith.constant 8 : i32
    %71 = arith.muli %c1_i32, %c8_i32_38 : i32
    %72 = tpu.assume_multiple %71, 8 : i32
    %73 = arith.index_cast %72 : i32 to index
    %c0_39 = arith.constant 0 : index
    %74 = vector.load %arg17[%73, %c0_39] : memref<64x128xf32, #tpu.memory_space<vmem>>, vector<8x128xf32>
    %cst_40 = arith.constant dense<0.000000e+00> : vector<8x128xf32>
    %75 = tpu.matmul %68, %45, %cst_40 {dimension_numbers = #tpu.dot_dimension_numbers<[1], [0], [0], [1], [0, 0, 1, 1], [], []>} : vector<8x32xf32>, vector<32x128xf32>, vector<8x128xf32> -> vector<8x128xf32>
    %76 = arith.addf %74, %75 : vector<8x128xf32>
    %77 = vector.extract_strided_slice %76 {offsets = [0, 0], sizes = [8, 96], strides = [1, 1]} : vector<8x128xf32> to vector<8x96xf32>
    %78 = arith.negf %77 : vector<8x96xf32>
    %79 = math.exp %78 : vector<8x96xf32>
    %cst_41 = arith.constant 1.000000e+00 : f32
    %80 = vector.broadcast %cst_41 : f32 to vector<8x96xf32>
    %81 = arith.addf %80, %79 : vector<8x96xf32>
    %82 = arith.divf %80, %81 : vector<8x96xf32>
    %83 = vector.extract_strided_slice %76 {offsets = [0, 96], sizes = [8, 32], strides = [1, 1]} : vector<8x128xf32> to vector<8x32xf32>
    %84 = math.tanh %83 : vector<8x32xf32>
    %85 = vector.extract_strided_slice %82 {offsets = [0, 0], sizes = [8, 32], strides = [1, 1]} : vector<8x96xf32> to vector<8x32xf32>
    %86 = vector.extract_strided_slice %82 {offsets = [0, 32], sizes = [8, 32], strides = [1, 1]} : vector<8x96xf32> to vector<8x32xf32>
    %87 = vector.extract_strided_slice %82 {offsets = [0, 64], sizes = [8, 32], strides = [1, 1]} : vector<8x96xf32> to vector<8x32xf32>
    %88 = arith.mulf %86, %66 : vector<8x32xf32>
    %89 = arith.mulf %85, %84 : vector<8x32xf32>
    %90 = arith.addf %88, %89 : vector<8x32xf32>
    %91 = math.tanh %90 : vector<8x32xf32>
    %92 = arith.mulf %87, %91 : vector<8x32xf32>
    %93 = arith.index_cast %72 : i32 to index
    %c0_42 = arith.constant 0 : index
    %94 = vector.load %arg18[%93, %c0_42] : memref<64x32xf32, #tpu.memory_space<vmem>>, vector<8x32xf32>
    tpu.vector_store %arg18[%93, %c0_42], %92 {strides = array<i32>} : memref<64x32xf32, #tpu.memory_space<vmem>>, vector<8x32xf32>,
    %c2_i32 = arith.constant 2 : i32
    %c8_i32_43 = arith.constant 8 : i32
    %95 = arith.muli %c2_i32, %c8_i32_43 : i32
    %96 = tpu.assume_multiple %95, 8 : i32
    %97 = arith.index_cast %96 : i32 to index
    %c0_44 = arith.constant 0 : index
    %98 = vector.load %arg17[%97, %c0_44] : memref<64x128xf32, #tpu.memory_space<vmem>>, vector<8x128xf32>
    %cst_45 = arith.constant dense<0.000000e+00> : vector<8x128xf32>
    %99 = tpu.matmul %92, %45, %cst_45 {dimension_numbers = #tpu.dot_dimension_numbers<[1], [0], [0], [1], [0, 0, 1, 1], [], []>} : vector<8x32xf32>, vector<32x128xf32>, vector<8x128xf32> -> vector<8x128xf32>
    %100 = arith.addf %98, %99 : vector<8x128xf32>
    %101 = vector.extract_strided_slice %100 {offsets = [0, 0], sizes = [8, 96], strides = [1, 1]} : vector<8x128xf32> to vector<8x96xf32>
    %102 = arith.negf %101 : vector<8x96xf32>
    %103 = math.exp %102 : vector<8x96xf32>
    %cst_46 = arith.constant 1.000000e+00 : f32
    %104 = vector.broadcast %cst_46 : f32 to vector<8x96xf32>
    %105 = arith.addf %104, %103 : vector<8x96xf32>
    %106 = arith.divf %104, %105 : vector<8x96xf32>
    %107 = vector.extract_strided_slice %100 {offsets = [0, 96], sizes = [8, 32], strides = [1, 1]} : vector<8x128xf32> to vector<8x32xf32>
    %108 = math.tanh %107 : vector<8x32xf32>
    %109 = vector.extract_strided_slice %106 {offsets = [0, 0], sizes = [8, 32], strides = [1, 1]} : vector<8x96xf32> to vector<8x32xf32>
    %110 = vector.extract_strided_slice %106 {offsets = [0, 32], sizes = [8, 32], strides = [1, 1]} : vector<8x96xf32> to vector<8x32xf32>
    %111 = vector.extract_strided_slice %106 {offsets = [0, 64], sizes = [8, 32], strides = [1, 1]} : vector<8x96xf32> to vector<8x32xf32>
    %112 = arith.mulf %110, %90 : vector<8x32xf32>
    %113 = arith.mulf %109, %108 : vector<8x32xf32>
    %114 = arith.addf %112, %113 : vector<8x32xf32>
    %115 = math.tanh %114 : vector<8x32xf32>
    %116 = arith.mulf %111, %115 : vector<8x32xf32>
    %117 = arith.index_cast %96 : i32 to index
    %c0_47 = arith.constant 0 : index
    %118 = vector.load %arg18[%117, %c0_47] : memref<64x32xf32, #tpu.memory_space<vmem>>, vector<8x32xf32>
    tpu.vector_store %arg18[%117, %c0_47], %116 {strides = array<i32>} : memref<64x32xf32, #tpu.memory_space<vmem>>, vector<8x32xf32>,
    %c3_i32 = arith.constant 3 : i32
    %c8_i32_48 = arith.constant 8 : i32
    %119 = arith.muli %c3_i32, %c8_i32_48 : i32
    %120 = tpu.assume_multiple %119, 8 : i32
    %121 = arith.index_cast %120 : i32 to index
    %c0_49 = arith.constant 0 : index
    %122 = vector.load %arg17[%121, %c0_49] : memref<64x128xf32, #tpu.memory_space<vmem>>, vector<8x128xf32>
    %cst_50 = arith.constant dense<0.000000e+00> : vector<8x128xf32>
    %123 = tpu.matmul %116, %45, %cst_50 {dimension_numbers = #tpu.dot_dimension_numbers<[1], [0], [0], [1], [0, 0, 1, 1], [], []>} : vector<8x32xf32>, vector<32x128xf32>, vector<8x128xf32> -> vector<8x128xf32>
    %124 = arith.addf %122, %123 : vector<8x128xf32>
    %125 = vector.extract_strided_slice %124 {offsets = [0, 0], sizes = [8, 96], strides = [1, 1]} : vector<8x128xf32> to vector<8x96xf32>
    %126 = arith.negf %125 : vector<8x96xf32>
    %127 = math.exp %126 : vector<8x96xf32>
    %cst_51 = arith.constant 1.000000e+00 : f32
    %128 = vector.broadcast %cst_51 : f32 to vector<8x96xf32>
    %129 = arith.addf %128, %127 : vector<8x96xf32>
    %130 = arith.divf %128, %129 : vector<8x96xf32>
    %131 = vector.extract_strided_slice %124 {offsets = [0, 96], sizes = [8, 32], strides = [1, 1]} : vector<8x128xf32> to vector<8x32xf32>
    %132 = math.tanh %131 : vector<8x32xf32>
    %133 = vector.extract_strided_slice %130 {offsets = [0, 0], sizes = [8, 32], strides = [1, 1]} : vector<8x96xf32> to vector<8x32xf32>
    %134 = vector.extract_strided_slice %130 {offsets = [0, 32], sizes = [8, 32], strides = [1, 1]} : vector<8x96xf32> to vector<8x32xf32>
    %135 = vector.extract_strided_slice %130 {offsets = [0, 64], sizes = [8, 32], strides = [1, 1]} : vector<8x96xf32> to vector<8x32xf32>
    %136 = arith.mulf %134, %114 : vector<8x32xf32>
    %137 = arith.mulf %133, %132 : vector<8x32xf32>
    %138 = arith.addf %136, %137 : vector<8x32xf32>
    %139 = math.tanh %138 : vector<8x32xf32>
    %140 = arith.mulf %135, %139 : vector<8x32xf32>
    %141 = arith.index_cast %120 : i32 to index
    %c0_52 = arith.constant 0 : index
    %142 = vector.load %arg18[%141, %c0_52] : memref<64x32xf32, #tpu.memory_space<vmem>>, vector<8x32xf32>
    tpu.vector_store %arg18[%141, %c0_52], %140 {strides = array<i32>} : memref<64x32xf32, #tpu.memory_space<vmem>>, vector<8x32xf32>,
    %c4_i32 = arith.constant 4 : i32
    %c8_i32_53 = arith.constant 8 : i32
    %143 = arith.muli %c4_i32, %c8_i32_53 : i32
    %144 = tpu.assume_multiple %143, 8 : i32
    %145 = arith.index_cast %144 : i32 to index
    %c0_54 = arith.constant 0 : index
    %146 = vector.load %arg17[%145, %c0_54] : memref<64x128xf32, #tpu.memory_space<vmem>>, vector<8x128xf32>
    %cst_55 = arith.constant dense<0.000000e+00> : vector<8x128xf32>
    %147 = tpu.matmul %140, %45, %cst_55 {dimension_numbers = #tpu.dot_dimension_numbers<[1], [0], [0], [1], [0, 0, 1, 1], [], []>} : vector<8x32xf32>, vector<32x128xf32>, vector<8x128xf32> -> vector<8x128xf32>
    %148 = arith.addf %146, %147 : vector<8x128xf32>
    %149 = vector.extract_strided_slice %148 {offsets = [0, 0], sizes = [8, 96], strides = [1, 1]} : vector<8x128xf32> to vector<8x96xf32>
    %150 = arith.negf %149 : vector<8x96xf32>
    %151 = math.exp %150 : vector<8x96xf32>
    %cst_56 = arith.constant 1.000000e+00 : f32
    %152 = vector.broadcast %cst_56 : f32 to vector<8x96xf32>
    %153 = arith.addf %152, %151 : vector<8x96xf32>
    %154 = arith.divf %152, %153 : vector<8x96xf32>
    %155 = vector.extract_strided_slice %148 {offsets = [0, 96], sizes = [8, 32], strides = [1, 1]} : vector<8x128xf32> to vector<8x32xf32>
    %156 = math.tanh %155 : vector<8x32xf32>
    %157 = vector.extract_strided_slice %154 {offsets = [0, 0], sizes = [8, 32], strides = [1, 1]} : vector<8x96xf32> to vector<8x32xf32>
    %158 = vector.extract_strided_slice %154 {offsets = [0, 32], sizes = [8, 32], strides = [1, 1]} : vector<8x96xf32> to vector<8x32xf32>
    %159 = vector.extract_strided_slice %154 {offsets = [0, 64], sizes = [8, 32], strides = [1, 1]} : vector<8x96xf32> to vector<8x32xf32>
    %160 = arith.mulf %158, %138 : vector<8x32xf32>
    %161 = arith.mulf %157, %156 : vector<8x32xf32>
    %162 = arith.addf %160, %161 : vector<8x32xf32>
    %163 = math.tanh %162 : vector<8x32xf32>
    %164 = arith.mulf %159, %163 : vector<8x32xf32>
    %165 = arith.index_cast %144 : i32 to index
    %c0_57 = arith.constant 0 : index
    %166 = vector.load %arg18[%165, %c0_57] : memref<64x32xf32, #tpu.memory_space<vmem>>, vector<8x32xf32>
    tpu.vector_store %arg18[%165, %c0_57], %164 {strides = array<i32>} : memref<64x32xf32, #tpu.memory_space<vmem>>, vector<8x32xf32>,
    %c5_i32 = arith.constant 5 : i32
    %c8_i32_58 = arith.constant 8 : i32
    %167 = arith.muli %c5_i32, %c8_i32_58 : i32
    %168 = tpu.assume_multiple %167, 8 : i32
    %169 = arith.index_cast %168 : i32 to index
    %c0_59 = arith.constant 0 : index
    %170 = vector.load %arg17[%169, %c0_59] : memref<64x128xf32, #tpu.memory_space<vmem>>, vector<8x128xf32>
    %cst_60 = arith.constant dense<0.000000e+00> : vector<8x128xf32>
    %171 = tpu.matmul %164, %45, %cst_60 {dimension_numbers = #tpu.dot_dimension_numbers<[1], [0], [0], [1], [0, 0, 1, 1], [], []>} : vector<8x32xf32>, vector<32x128xf32>, vector<8x128xf32> -> vector<8x128xf32>
    %172 = arith.addf %170, %171 : vector<8x128xf32>
    %173 = vector.extract_strided_slice %172 {offsets = [0, 0], sizes = [8, 96], strides = [1, 1]} : vector<8x128xf32> to vector<8x96xf32>
    %174 = arith.negf %173 : vector<8x96xf32>
    %175 = math.exp %174 : vector<8x96xf32>
    %cst_61 = arith.constant 1.000000e+00 : f32
    %176 = vector.broadcast %cst_61 : f32 to vector<8x96xf32>
    %177 = arith.addf %176, %175 : vector<8x96xf32>
    %178 = arith.divf %176, %177 : vector<8x96xf32>
    %179 = vector.extract_strided_slice %172 {offsets = [0, 96], sizes = [8, 32], strides = [1, 1]} : vector<8x128xf32> to vector<8x32xf32>
    %180 = math.tanh %179 : vector<8x32xf32>
    %181 = vector.extract_strided_slice %178 {offsets = [0, 0], sizes = [8, 32], strides = [1, 1]} : vector<8x96xf32> to vector<8x32xf32>
    %182 = vector.extract_strided_slice %178 {offsets = [0, 32], sizes = [8, 32], strides = [1, 1]} : vector<8x96xf32> to vector<8x32xf32>
    %183 = vector.extract_strided_slice %178 {offsets = [0, 64], sizes = [8, 32], strides = [1, 1]} : vector<8x96xf32> to vector<8x32xf32>
    %184 = arith.mulf %182, %162 : vector<8x32xf32>
    %185 = arith.mulf %181, %180 : vector<8x32xf32>
    %186 = arith.addf %184, %185 : vector<8x32xf32>
    %187 = math.tanh %186 : vector<8x32xf32>
    %188 = arith.mulf %183, %187 : vector<8x32xf32>
    %189 = arith.index_cast %168 : i32 to index
    %c0_62 = arith.constant 0 : index
    %190 = vector.load %arg18[%189, %c0_62] : memref<64x32xf32, #tpu.memory_space<vmem>>, vector<8x32xf32>
    tpu.vector_store %arg18[%189, %c0_62], %188 {strides = array<i32>} : memref<64x32xf32, #tpu.memory_space<vmem>>, vector<8x32xf32>,
    %c6_i32 = arith.constant 6 : i32
    %c8_i32_63 = arith.constant 8 : i32
    %191 = arith.muli %c6_i32, %c8_i32_63 : i32
    %192 = tpu.assume_multiple %191, 8 : i32
    %193 = arith.index_cast %192 : i32 to index
    %c0_64 = arith.constant 0 : index
    %194 = vector.load %arg17[%193, %c0_64] : memref<64x128xf32, #tpu.memory_space<vmem>>, vector<8x128xf32>
    %cst_65 = arith.constant dense<0.000000e+00> : vector<8x128xf32>
    %195 = tpu.matmul %188, %45, %cst_65 {dimension_numbers = #tpu.dot_dimension_numbers<[1], [0], [0], [1], [0, 0, 1, 1], [], []>} : vector<8x32xf32>, vector<32x128xf32>, vector<8x128xf32> -> vector<8x128xf32>
    %196 = arith.addf %194, %195 : vector<8x128xf32>
    %197 = vector.extract_strided_slice %196 {offsets = [0, 0], sizes = [8, 96], strides = [1, 1]} : vector<8x128xf32> to vector<8x96xf32>
    %198 = arith.negf %197 : vector<8x96xf32>
    %199 = math.exp %198 : vector<8x96xf32>
    %cst_66 = arith.constant 1.000000e+00 : f32
    %200 = vector.broadcast %cst_66 : f32 to vector<8x96xf32>
    %201 = arith.addf %200, %199 : vector<8x96xf32>
    %202 = arith.divf %200, %201 : vector<8x96xf32>
    %203 = vector.extract_strided_slice %196 {offsets = [0, 96], sizes = [8, 32], strides = [1, 1]} : vector<8x128xf32> to vector<8x32xf32>
    %204 = math.tanh %203 : vector<8x32xf32>
    %205 = vector.extract_strided_slice %202 {offsets = [0, 0], sizes = [8, 32], strides = [1, 1]} : vector<8x96xf32> to vector<8x32xf32>
    %206 = vector.extract_strided_slice %202 {offsets = [0, 32], sizes = [8, 32], strides = [1, 1]} : vector<8x96xf32> to vector<8x32xf32>
    %207 = vector.extract_strided_slice %202 {offsets = [0, 64], sizes = [8, 32], strides = [1, 1]} : vector<8x96xf32> to vector<8x32xf32>
    %208 = arith.mulf %206, %186 : vector<8x32xf32>
    %209 = arith.mulf %205, %204 : vector<8x32xf32>
    %210 = arith.addf %208, %209 : vector<8x32xf32>
    %211 = math.tanh %210 : vector<8x32xf32>
    %212 = arith.mulf %207, %211 : vector<8x32xf32>
    %213 = arith.index_cast %192 : i32 to index
    %c0_67 = arith.constant 0 : index
    %214 = vector.load %arg18[%213, %c0_67] : memref<64x32xf32, #tpu.memory_space<vmem>>, vector<8x32xf32>
    tpu.vector_store %arg18[%213, %c0_67], %212 {strides = array<i32>} : memref<64x32xf32, #tpu.memory_space<vmem>>, vector<8x32xf32>,
    %c7_i32 = arith.constant 7 : i32
    %c8_i32_68 = arith.constant 8 : i32
    %215 = arith.muli %c7_i32, %c8_i32_68 : i32
    %216 = tpu.assume_multiple %215, 8 : i32
    %217 = arith.index_cast %216 : i32 to index
    %c0_69 = arith.constant 0 : index
    %218 = vector.load %arg17[%217, %c0_69] : memref<64x128xf32, #tpu.memory_space<vmem>>, vector<8x128xf32>
    %cst_70 = arith.constant dense<0.000000e+00> : vector<8x128xf32>
    %219 = tpu.matmul %212, %45, %cst_70 {dimension_numbers = #tpu.dot_dimension_numbers<[1], [0], [0], [1], [0, 0, 1, 1], [], []>} : vector<8x32xf32>, vector<32x128xf32>, vector<8x128xf32> -> vector<8x128xf32>
    %220 = arith.addf %218, %219 : vector<8x128xf32>
    %221 = vector.extract_strided_slice %220 {offsets = [0, 0], sizes = [8, 96], strides = [1, 1]} : vector<8x128xf32> to vector<8x96xf32>
    %222 = arith.negf %221 : vector<8x96xf32>
    %223 = math.exp %222 : vector<8x96xf32>
    %cst_71 = arith.constant 1.000000e+00 : f32
    %224 = vector.broadcast %cst_71 : f32 to vector<8x96xf32>
    %225 = arith.addf %224, %223 : vector<8x96xf32>
    %226 = arith.divf %224, %225 : vector<8x96xf32>
    %227 = vector.extract_strided_slice %220 {offsets = [0, 96], sizes = [8, 32], strides = [1, 1]} : vector<8x128xf32> to vector<8x32xf32>
    %228 = math.tanh %227 : vector<8x32xf32>
    %229 = vector.extract_strided_slice %226 {offsets = [0, 0], sizes = [8, 32], strides = [1, 1]} : vector<8x96xf32> to vector<8x32xf32>
    %230 = vector.extract_strided_slice %226 {offsets = [0, 32], sizes = [8, 32], strides = [1, 1]} : vector<8x96xf32> to vector<8x32xf32>
    %231 = vector.extract_strided_slice %226 {offsets = [0, 64], sizes = [8, 32], strides = [1, 1]} : vector<8x96xf32> to vector<8x32xf32>
    %232 = arith.mulf %230, %210 : vector<8x32xf32>
    %233 = arith.mulf %229, %228 : vector<8x32xf32>
    %234 = arith.addf %232, %233 : vector<8x32xf32>
    %235 = math.tanh %234 : vector<8x32xf32>
    %236 = arith.mulf %231, %235 : vector<8x32xf32>
    %237 = arith.index_cast %216 : i32 to index
    %c0_72 = arith.constant 0 : index
    %238 = vector.load %arg18[%237, %c0_72] : memref<64x32xf32, #tpu.memory_space<vmem>>, vector<8x32xf32>
    tpu.vector_store %arg18[%237, %c0_72], %236 {strides = array<i32>} : memref<64x32xf32, #tpu.memory_space<vmem>>, vector<8x32xf32>,
    %c8_i32_73 = arith.constant 8 : i32
    %c0_74 = arith.constant 0 : index
    %c0_75 = arith.constant 0 : index
    %239 = vector.load %arg15[%c0_74, %c0_75] : memref<8x32xf32, #tpu.memory_space<vmem>>, vector<8x32xf32>
    tpu.vector_store %arg15[%c0_74, %c0_75], %234 {strides = array<i32>} : memref<8x32xf32, #tpu.memory_space<vmem>>, vector<8x32xf32>,
    %c0_76 = arith.constant 0 : index
    %c0_77 = arith.constant 0 : index
    %240 = vector.load %arg18[%c0_76, %c0_77] : memref<64x32xf32, #tpu.memory_space<vmem>>, vector<64x32xf32>
    %241 = vector.shape_cast %240 : vector<64x32xf32> to vector<8x8x32xf32>
    %c0_78 = arith.constant 0 : index
    %c0_79 = arith.constant 0 : index
    %c0_80 = arith.constant 0 : index
    %242 = vector.load %arg13[%c0_78, %c0_79, %c0_80] : memref<8x8x32xf32, #tpu.memory_space<vmem>>, vector<8x8x32xf32>
    tpu.vector_store %arg13[%c0_78, %c0_79, %c0_80], %241 {strides = array<i32>} : memref<8x8x32xf32, #tpu.memory_space<vmem>>, vector<8x8x32xf32>,
    %c0_81 = arith.constant 0 : index
    %c0_82 = arith.constant 0 : index
    %243 = vector.load %arg18[%c0_81, %c0_82] : memref<64x32xf32, #tpu.memory_space<vmem>>, vector<64x32xf32>
    %244 = arith.truncf %243 : vector<64x32xf32> to vector<64x32xbf16>
    %c0_83 = arith.constant 0 : index
    %c0_84 = arith.constant 0 : index
    %245 = vector.load %arg12[%c0_83, %c0_84] : memref<32x128xbf16, #tpu.memory_space<vmem>>, vector<32x128xbf16>
    %cst_85 = arith.constant dense<0.000000e+00> : vector<64x128xf32>
    %246 = tpu.matmul %244, %245, %cst_85 {dimension_numbers = #tpu.dot_dimension_numbers<[1], [0], [0], [1], [0, 0, 1, 1], [], []>} : vector<64x32xbf16>, vector<32x128xbf16>, vector<64x128xf32> -> vector<64x128xf32>
    %247 = vector.shape_cast %246 : vector<64x128xf32> to vector<8x8x128xf32>
    %c0_86 = arith.constant 0 : index
    %c0_87 = arith.constant 0 : index
    %c0_88 = arith.constant 0 : index
    %248 = vector.load %arg16[%c0_86, %c0_87, %c0_88] : memref<8x8x128xf32, #tpu.memory_space<vmem>>, vector<8x8x128xf32>
    tpu.vector_store %arg16[%c0_86, %c0_87, %c0_88], %247 {strides = array<i32>} : memref<8x8x128xf32, #tpu.memory_space<vmem>>, vector<8x8x128xf32>,
    return
  }
  func.func @transform_0(%arg0: i32) -> (i32, i32, i32) {
    %c0_i32 = arith.constant 0 : i32
    %c0_i32_0 = arith.constant 0 : i32
    %c0_i32_1 = arith.constant 0 : i32
    return %c0_i32, %arg0, %c0_i32_0 : i32, i32, i32
  }
  func.func @transform_1(%arg0: i32) -> (i32, i32) {
    %c0_i32 = arith.constant 0 : i32
    %c0_i32_0 = arith.constant 0 : i32
    return %arg0, %c0_i32 : i32, i32
  }
  func.func @transform_2(%arg0: i32) -> (i32, i32) {
    %c0_i32 = arith.constant 0 : i32
    %c0_i32_0 = arith.constant 0 : i32
    return %arg0, %c0_i32 : i32, i32
  }
  func.func @transform_3(%arg0: i32) -> (i32, i32, i32) {
    %c0_i32 = arith.constant 0 : i32
    %c0_i32_0 = arith.constant 0 : i32
    %c0_i32_1 = arith.constant 0 : i32
    return %c0_i32, %arg0, %c0_i32_0 : i32, i32, i32
  }
  func.func @transform_4(%arg0: i32) -> (i32, i32) {
    %c0_i32 = arith.constant 0 : i32
    %c0_i32_0 = arith.constant 0 : i32
    %c0_i32_1 = arith.constant 0 : i32
    return %c0_i32, %c0_i32_0 : i32, i32
  }
  func.func @transform_5(%arg0: i32) -> (i32, i32) {
    %c0_i32 = arith.constant 0 : i32
    %c0_i32_0 = arith.constant 0 : i32
    %c0_i32_1 = arith.constant 0 : i32
    return %c0_i32, %c0_i32_0 : i32, i32
  }
  func.func @transform_6(%arg0: i32) -> (i32, i32) {
    %c0_i32 = arith.constant 0 : i32
    %c0_i32_0 = arith.constant 0 : i32
    %c0_i32_1 = arith.constant 0 : i32
    return %c0_i32, %c0_i32_0 : i32, i32
  }
  func.func @transform_7(%arg0: i32) -> (i32, i32) {
    %c0_i32 = arith.constant 0 : i32
    %c0_i32_0 = arith.constant 0 : i32
    %c0_i32_1 = arith.constant 0 : i32
    return %c0_i32, %c0_i32_0 : i32, i32
  }
  func.func @transform_8(%arg0: i32) -> (i32, i32) {
    %c0_i32 = arith.constant 0 : i32
    %c0_i32_0 = arith.constant 0 : i32
    %c0_i32_1 = arith.constant 0 : i32
    return %c0_i32, %c0_i32_0 : i32, i32
  }
  func.func @transform_9(%arg0: i32) -> (i32, i32) {
    %c0_i32 = arith.constant 0 : i32
    %c0_i32_0 = arith.constant 0 : i32
    %c0_i32_1 = arith.constant 0 : i32
    return %c0_i32, %c0_i32_0 : i32, i32
  }
  func.func @transform_10(%arg0: i32) -> (i32, i32) {
    %c0_i32 = arith.constant 0 : i32
    %c0_i32_0 = arith.constant 0 : i32
    %c0_i32_1 = arith.constant 0 : i32
    return %c0_i32, %c0_i32_0 : i32, i32
  }
  func.func @transform_11(%arg0: i32) -> (i32, i32) {
    %c0_i32 = arith.constant 0 : i32
    %c0_i32_0 = arith.constant 0 : i32
    %c0_i32_1 = arith.constant 0 : i32
    return %c0_i32, %c0_i32_0 : i32, i32
  }
  func.func @transform_12(%arg0: i32) -> (i32, i32, i32) {
    %c0_i32 = arith.constant 0 : i32
    %c0_i32_0 = arith.constant 0 : i32
    %c0_i32_1 = arith.constant 0 : i32
    return %c0_i32, %arg0, %c0_i32_0 : i32, i32, i32
  }
  func.func @transform_13(%arg0: i32) -> (i32, i32) {
    %c0_i32 = arith.constant 0 : i32
    %c0_i32_0 = arith.constant 0 : i32
    return %arg0, %c0_i32 : i32, i32
  }
  func.func @transform_14(%arg0: i32) -> (i32, i32) {
    %c0_i32 = arith.constant 0 : i32
    %c0_i32_0 = arith.constant 0 : i32
    return %arg0, %c0_i32 : i32, i32
  }
  func.func @transform_15(%arg0: i32) -> (i32, i32, i32) {
    %c0_i32 = arith.constant 0 : i32
    %c0_i32_0 = arith.constant 0 : i32
    %c0_i32_1 = arith.constant 0 : i32
    return %c0_i32, %arg0, %c0_i32_0 : i32, i32, i32
  }
}

</mosaic_0001>

<llo_original>
// kernel: tpu_custom_call.1
$region0: #{tpu_custom_call.1}
  #allocation0 [shape = 'u32[]', space=smem, size = 0x4, offset = 0x4, fixed_abs, tag = 'smem constant byte address 0x4 - core index']
  #allocation1 [shape = 'u32[144,128]{1,0:T(1,128)}', space=vmem, size = 0x12000, scoped, tag = 'internal scratch']
  #allocation2 [shape = 'f32[64,128]{1,0:T(8,128)}', space=vmem, size = 0x8000, scoped, tag = 'scratch operand']
  #allocation3 [shape = 'f32[64,32]{1,0:T(8,128)}', space=vmem, size = 0x8000, scoped, tag = 'scratch operand']
  %s0 = inlined_call_operand.hbm [shape: f32[8,8,16], index: 0, kind: input, shape index: {}]
  %s1 = inlined_call_operand.hbm [shape: f32[8,32], index: 1, kind: input, shape index: {}]
  %s2 = inlined_call_operand.hbm [shape: f32[8,32], index: 2, kind: input, shape index: {}]
  %s3 = inlined_call_operand.hbm [shape: f32[8,8,32], index: 3, kind: input, shape index: {}]
  %s4 = inlined_call_operand.vmem [shape: f32[1,32], index: 4, kind: input, shape index: {}]
  %s5 = inlined_call_operand.vmem [shape: f32[1,32], index: 5, kind: input, shape index: {}]
  %s6 = inlined_call_operand.hbm [shape: f32[32,32], index: 6, kind: input, shape index: {}]
  %s7 = inlined_call_operand.hbm [shape: f32[32,32], index: 7, kind: input, shape index: {}]
  %s8 = inlined_call_operand.hbm [shape: bf16[16,128], index: 8, kind: input, shape index: {}]
  %s9 = inlined_call_operand.hbm [shape: f32[32,128], index: 9, kind: input, shape index: {}]
  %s10 = inlined_call_operand.vmem [shape: f32[1,128], index: 10, kind: input, shape index: {}]
  %s11 = inlined_call_operand.vmem [shape: bf16[32,128], index: 11, kind: input, shape index: {}]
  %s12 = inlined_call_operand.hbm [shape: f32[8,8,32], index: 12, kind: output, shape index: {0}]
  %s13 = inlined_call_operand.hbm [shape: f32[8,32], index: 13, kind: output, shape index: {1}]
  %s14 = inlined_call_operand.hbm [shape: f32[8,32], index: 14, kind: output, shape index: {2}]
  %s15 = inlined_call_operand.hbm [shape: f32[8,8,128], index: 15, kind: output, shape index: {3}]
  %16 = xla_tuple %s12, %s13, %s14, %s15
  %s17 = sld [smem:[#allocation0]]
  $region114: #{tpu_custom_call.1} parent=0
    _
  %s19 = ssub.s32 1, %s17
  %s20 = scalar_select 0, %s19, %s17
  $region1: #{tpu_custom_call.1} parent=0
    #allocation4 [shape = 'u8[32768]{0}', space=vmem, size = 0x8000, scoped, tag = 'input window, operand 0, single buffered']
    #allocation5 [shape = 's32[1]{0}', space=sflag, size = 0x4, scoped, tag = 'scoped memory for tpu_custom_call.1']
    #allocation6 [shape = 's32[1]{0}', space=sflag, size = 0x4, scoped, tag = 'scoped memory for tpu_custom_call.1']
    #allocation7 [shape = 'u8[4096]{0}', space=vmem, size = 0x1000, scoped, tag = 'input window, operand 1, single buffered']
    #allocation8 [shape = 's32[1]{0}', space=sflag, size = 0x4, scoped, tag = 'scoped memory for tpu_custom_call.1']
    #allocation9 [shape = 'u8[4096]{0}', space=vmem, size = 0x1000, scoped, tag = 'input window, operand 2, single buffered']
    #allocation10 [shape = 'u8[32768]{0}', space=vmem, size = 0x8000, scoped, tag = 'input window, operand 3, single buffered']
    #allocation11 [shape = 's32[1]{0}', space=sflag, size = 0x4, scoped, tag = 'scoped memory for tpu_custom_call.1']
    #allocation12 [shape = 'u8[16384]{0}', space=vmem, size = 0x4000, scoped, tag = 'input window, operand 6, single buffered']
    #allocation13 [shape = 'u8[16384]{0}', space=vmem, size = 0x4000, scoped, tag = 'input window, operand 7, single buffered']
    #allocation14 [shape = 's32[1]{0}', space=sflag, size = 0x4, scoped, tag = 'scoped memory for tpu_custom_call.1']
    #allocation15 [shape = 'u8[4096]{0}', space=vmem, size = 0x1000, scoped, tag = 'input window, operand 8, single buffered']
    #allocation16 [shape = 'u8[16384]{0}', space=vmem, size = 0x4000, scoped, tag = 'input window, operand 9, single buffered']
    #allocation17 [shape = 's32[1]{0}', space=sflag, size = 0x4, scoped, tag = 'scoped memory for tpu_custom_call.1']
    #allocation18 [shape = 'u8[32768]{0}', space=vmem, size = 0x8000, scoped, tag = 'output window, operand 0, single buffered']
    #allocation19 [shape = 'u8[4096]{0}', space=vmem, size = 0x1000, scoped, tag = 'output window, operand 1, single buffered']
    #allocation20 [shape = 's32[1]{0}', space=sflag, size = 0x4, scoped, tag = 'scoped memory for tpu_custom_call.1']
    #allocation21 [shape = 'u8[4096]{0}', space=vmem, size = 0x1000, scoped, tag = 'output window, operand 2, single buffered']
    #allocation22 [shape = 'u8[32768]{0}', space=vmem, size = 0x8000, scoped, tag = 'output window, operand 3, single buffered']
    #allocation23 [shape = 's32[1]{0}', space=sflag, size = 0x4, scoped, tag = 'scoped memory for tpu_custom_call.1']
    %21 = vsyncpa [#allocation5], 0
    %22 = vsyncpa [#allocation8], 0
    %23 = vsyncpa [#allocation11], 0
    %24 = vsyncpa [#allocation14], 0
    %25 = vsyncpa [#allocation17], 0
    %26 = vsyncpa [#allocation6], 0
    %27 = vsyncpa [#allocation20], 0
    %28 = vsyncpa [#allocation23], 0
    // Predicated region
    $region2: #{tpu_custom_call.1} parent=1 // pred_check
      _
    $region3: #{tpu_custom_call.1} parent=1 // pred_check_branch
      %30 = sbr.rel (0) target = $region5
    $region4: #{tpu_custom_call.1} parent=1 // pred_region
      %s32 = ssub.s32 1024, 1024
      %33 = vsyncadd [#allocation5], %s32
      %s34 = sshll.u32 [#allocation4], 4
      %s35 = int_to_ptr.vmem [resolvable:$true] %s34
      %40 = dma.hbm_to_vmem [thread:$0]  %s0, 1024, %s35, [#allocation5], 128, 128, 8
    $region5: #{tpu_custom_call.1} parent=1 // pred_fallthru
      _
    // Predicated region
    $region6: #{tpu_custom_call.1} parent=1 // pred_check
      _
    $region7: #{tpu_custom_call.1} parent=1 // pred_check_branch
      %42 = sbr.rel (0) target = $region9
    $region8: #{tpu_custom_call.1} parent=1 // pred_region
      %s44 = ssub.s32 128, 128
      %45 = vsyncadd [#allocation8], %s44
      %s47 = sshll.u32 [#allocation7], 4
      %s48 = int_to_ptr.vmem [resolvable:$true] %s47
      %50 = dma.hbm_to_vmem [thread:$0]  %s1, 128, %s48, [#allocation8]
    $region9: #{tpu_custom_call.1} parent=1 // pred_fallthru
      _
    // Predicated region
    $region10: #{tpu_custom_call.1} parent=1 // pred_check
      _
    $region11: #{tpu_custom_call.1} parent=1 // pred_check_branch
      %52 = sbr.rel (0) target = $region13
    $region12: #{tpu_custom_call.1} parent=1 // pred_region
      %s54 = ssub.s32 128, 128
      %55 = vsyncadd [#allocation8], %s54
      %s57 = sshll.u32 [#allocation9], 4
      %s58 = int_to_ptr.vmem [resolvable:$true] %s57
      %60 = dma.hbm_to_vmem [thread:$0]  %s2, 128, %s58, [#allocation8]
    $region13: #{tpu_custom_call.1} parent=1 // pred_fallthru
      _
    // Predicated region
    $region14: #{tpu_custom_call.1} parent=1 // pred_check
      _
    $region15: #{tpu_custom_call.1} parent=1 // pred_check_branch
      %62 = sbr.rel (0) target = $region17
    $region16: #{tpu_custom_call.1} parent=1 // pred_region
      %s64 = ssub.s32 1024, 1024
      %65 = vsyncadd [#allocation11], %s64
      %s66 = sshll.u32 [#allocation10], 4
      %s67 = int_to_ptr.vmem [resolvable:$true] %s66
      %72 = dma.hbm_to_vmem [thread:$0]  %s3, 1024, %s67, [#allocation11], 128, 128, 8
    $region17: #{tpu_custom_call.1} parent=1 // pred_fallthru
      _
    // Predicated region
    $region18: #{tpu_custom_call.1} parent=1 // pred_check
      _
    $region19: #{tpu_custom_call.1} parent=1 // pred_check_branch
      %74 = sbr.rel (0) target = $region21
    $region20: #{tpu_custom_call.1} parent=1 // pred_region
      _
    $region21: #{tpu_custom_call.1} parent=1 // pred_fallthru
      _
    // Predicated region
    $region22: #{tpu_custom_call.1} parent=1 // pred_check
      _
    $region23: #{tpu_custom_call.1} parent=1 // pred_check_branch
      %76 = sbr.rel (0) target = $region25
    $region24: #{tpu_custom_call.1} parent=1 // pred_region
      _
    $region25: #{tpu_custom_call.1} parent=1 // pred_fallthru
      _
    // Predicated region
    $region26: #{tpu_custom_call.1} parent=1 // pred_check
      _
    $region27: #{tpu_custom_call.1} parent=1 // pred_check_branch
      %78 = sbr.rel (0) target = $region29
    $region28: #{tpu_custom_call.1} parent=1 // pred_region
      %s80 = ssub.s32 512, 512
      %81 = vsyncadd [#allocation11], %s80
      %s82 = sshll.u32 [#allocation12], 4
      %s83 = int_to_ptr.vmem [resolvable:$true] %s82
      %88 = dma.hbm_to_vmem [thread:$0]  %s6, 512, %s83, [#allocation11], 128, 128, 8
    $region29: #{tpu_custom_call.1} parent=1 // pred_fallthru
      _
    // Predicated region
    $region30: #{tpu_custom_call.1} parent=1 // pred_check
      _
    $region31: #{tpu_custom_call.1} parent=1 // pred_check_branch
      %90 = sbr.rel (0) target = $region33
    $region32: #{tpu_custom_call.1} parent=1 // pred_region
      %s92 = ssub.s32 512, 512
      %93 = vsyncadd [#allocation14], %s92
      %s94 = sshll.u32 [#allocation13], 4
      %s95 = int_to_ptr.vmem [resolvable:$true] %s94
      %100 = dma.hbm_to_vmem [thread:$0]  %s7, 512, %s95, [#allocation14], 128, 128, 8
    $region33: #{tpu_custom_call.1} parent=1 // pred_fallthru
      _
    // Predicated region
    $region34: #{tpu_custom_call.1} parent=1 // pred_check
      _
    $region35: #{tpu_custom_call.1} parent=1 // pred_check_branch
      %102 = sbr.rel (0) target = $region37
    $region36: #{tpu_custom_call.1} parent=1 // pred_region
      %s104 = ssub.s32 128, 128
      %105 = vsyncadd [#allocation14], %s104
      %s106 = sshll.u32 [#allocation15], 4
      %s107 = int_to_ptr.vmem [resolvable:$true] %s106
      %112 = dma.hbm_to_vmem [thread:$0]  %s8, 128, %s107, [#allocation14], 64, 64, 4
    $region37: #{tpu_custom_call.1} parent=1 // pred_fallthru
      _
    // Predicated region
    $region38: #{tpu_custom_call.1} parent=1 // pred_check
      _
    $region39: #{tpu_custom_call.1} parent=1 // pred_check_branch
      %114 = sbr.rel (0) target = $region41
    $region40: #{tpu_custom_call.1} parent=1 // pred_region
      %s116 = ssub.s32 512, 512
      %117 = vsyncadd [#allocation17], %s116
      %s118 = sshll.u32 [#allocation16], 4
      %s119 = int_to_ptr.vmem [resolvable:$true] %s118
      %124 = dma.hbm_to_vmem [thread:$0]  %s9, 512, %s119, [#allocation17], 128, 128, 8
    $region41: #{tpu_custom_call.1} parent=1 // pred_fallthru
      _
    // Predicated region
    $region42: #{tpu_custom_call.1} parent=1 // pred_check
      _
    $region43: #{tpu_custom_call.1} parent=1 // pred_check_branch
      %126 = sbr.rel (0) target = $region45
    $region44: #{tpu_custom_call.1} parent=1 // pred_region
      _
    $region45: #{tpu_custom_call.1} parent=1 // pred_fallthru
      _
    // Predicated region
    $region46: #{tpu_custom_call.1} parent=1 // pred_check
      _
    $region47: #{tpu_custom_call.1} parent=1 // pred_check_branch
      %128 = sbr.rel (0) target = $region49
    $region48: #{tpu_custom_call.1} parent=1 // pred_region
      _
    $region49: #{tpu_custom_call.1} parent=1 // pred_fallthru
      _
    // Predicated region
    $region50: #{tpu_custom_call.1} parent=1 // pred_check
      _
    $region51: #{tpu_custom_call.1} parent=1 // pred_check_branch
      %130 = sbr.rel (0) target = $region53
    $region52: #{tpu_custom_call.1} parent=1 // pred_region
      %131 = dma.done [#allocation5], 1024
    $region53: #{tpu_custom_call.1} parent=1 // pred_fallthru
      _
    // Predicated region
    $region54: #{tpu_custom_call.1} parent=1 // pred_check
      _
    $region55: #{tpu_custom_call.1} parent=1 // pred_check_branch
      %133 = sbr.rel (0) target = $region57
    $region56: #{tpu_custom_call.1} parent=1 // pred_region
      %134 = dma.done [#allocation8], 128
    $region57: #{tpu_custom_call.1} parent=1 // pred_fallthru
      _
    // Predicated region
    $region58: #{tpu_custom_call.1} parent=1 // pred_check
      _
    $region59: #{tpu_custom_call.1} parent=1 // pred_check_branch
      %136 = sbr.rel (0) target = $region61
    $region60: #{tpu_custom_call.1} parent=1 // pred_region
      %137 = dma.done [#allocation8], 128
    $region61: #{tpu_custom_call.1} parent=1 // pred_fallthru
      _
    // Predicated region
    $region62: #{tpu_custom_call.1} parent=1 // pred_check
      _
    $region63: #{tpu_custom_call.1} parent=1 // pred_check_branch
      %139 = sbr.rel (0) target = $region65
    $region64: #{tpu_custom_call.1} parent=1 // pred_region
      %140 = dma.done [#allocation11], 1024
    $region65: #{tpu_custom_call.1} parent=1 // pred_fallthru
      _
    // Predicated region
    $region66: #{tpu_custom_call.1} parent=1 // pred_check
      _
    $region67: #{tpu_custom_call.1} parent=1 // pred_check_branch
      %142 = sbr.rel (0) target = $region69
    $region68: #{tpu_custom_call.1} parent=1 // pred_region
      %143 = dma.done [#allocation11], 512
    $region69: #{tpu_custom_call.1} parent=1 // pred_fallthru
      _
    // Predicated region
    $region70: #{tpu_custom_call.1} parent=1 // pred_check
      _
    $region71: #{tpu_custom_call.1} parent=1 // pred_check_branch
      %145 = sbr.rel (0) target = $region73
    $region72: #{tpu_custom_call.1} parent=1 // pred_region
      %146 = dma.done [#allocation14], 512
    $region73: #{tpu_custom_call.1} parent=1 // pred_fallthru
      _
    // Predicated region
    $region74: #{tpu_custom_call.1} parent=1 // pred_check
      _
    $region75: #{tpu_custom_call.1} parent=1 // pred_check_branch
      %148 = sbr.rel (0) target = $region77
    $region76: #{tpu_custom_call.1} parent=1 // pred_region
      %149 = dma.done [#allocation14], 128
    $region77: #{tpu_custom_call.1} parent=1 // pred_fallthru
      _
    // Predicated region
    $region78: #{tpu_custom_call.1} parent=1 // pred_check
      _
    $region79: #{tpu_custom_call.1} parent=1 // pred_check_branch
      %151 = sbr.rel (0) target = $region81
    $region80: #{tpu_custom_call.1} parent=1 // pred_region
      %152 = dma.done [#allocation17], 512
    $region81: #{tpu_custom_call.1} parent=1 // pred_fallthru
      _
    %v154 = vld [vmem:[#allocation7] sm:$0xff]
    %v155 = vld [vmem:[#allocation10] sm:$0xff]
    %v156 = vld [vmem:[#allocation10 + $0x8] sm:$0xff]
    %v157 = vld [vmem:[#allocation10 + $0x10] sm:$0xff]
    %v158 = vld [vmem:[#allocation10 + $0x18] sm:$0xff]
    %v159 = vld [vmem:[#allocation10 + $0x20] sm:$0xff]
    %v160 = vld [vmem:[#allocation10 + $0x28] sm:$0xff]
    %v161 = vld [vmem:[#allocation10 + $0x30] sm:$0xff]
    %v162 = vld [vmem:[#allocation10 + $0x38] sm:$0xff]
    %v163 = vld [vmem:[%s4] sm:$0x1]
    %v165 = vlaneseq
    %v166 = vshrl.u32 %v165, 7
    %v167 = vsub.s32 0, %v166
    %v168 = vrot.slane %v163, %v167
    %v170 = vmul.f32 %v154, %v168
    %vm171 = vcmask 261120
    %v172 = vsel %vm171, %v170, 0.0
    %173 = vadd.xlane.f32.xlu0 %v172
    %v174 = vpop.xlane.xlu0 %173
    %v175 = vld [vmem:[%s5] sm:$0x1]
    %v177 = vlaneseq
    %v178 = vshrl.u32 %v177, 7
    %v179 = vsub.s32 0, %v178
    %v180 = vrot.slane %v175, %v179
    %v182 = vmul.f32 %v155, %v180
    %v183 = vmul.f32 %v156, %v180
    %v184 = vmul.f32 %v157, %v180
    %v185 = vmul.f32 %v158, %v180
    %v186 = vmul.f32 %v159, %v180
    %v187 = vmul.f32 %v160, %v180
    %v188 = vmul.f32 %v161, %v180
    %v189 = vmul.f32 %v162, %v180
    %v190 = vsel %vm171, %v182, 0.0
    %191 = vadd.xlane.f32.xlu0 %v190
    %v192 = vpop.xlane.xlu0 %191
    %v193 = vsel %vm171, %v183, 0.0
    %194 = vadd.xlane.f32.xlu0 %v193
    %v195 = vpop.xlane.xlu0 %194
    %v196 = vsel %vm171, %v184, 0.0
    %197 = vadd.xlane.f32.xlu0 %v196
    %v198 = vpop.xlane.xlu0 %197
    %v199 = vsel %vm171, %v185, 0.0
    %200 = vadd.xlane.f32.xlu0 %v199
    %v201 = vpop.xlane.xlu0 %200
    %v202 = vsel %vm171, %v186, 0.0
    %203 = vadd.xlane.f32.xlu0 %v202
    %v204 = vpop.xlane.xlu0 %203
    %v205 = vsel %vm171, %v187, 0.0
    %206 = vadd.xlane.f32.xlu0 %v205
    %v207 = vpop.xlane.xlu0 %206
    %v208 = vsel %vm171, %v188, 0.0
    %209 = vadd.xlane.f32.xlu0 %v208
    %v210 = vpop.xlane.xlu0 %209
    %v211 = vsel %vm171, %v189, 0.0
    %212 = vadd.xlane.f32.xlu0 %v211
    %v213 = vpop.xlane.xlu0 %212
    %v214 = vadd.f32 %v174, %v192
    %v215 = vadd.f32 %v174, %v195
    %v216 = vadd.f32 %v174, %v198
    %v217 = vadd.f32 %v174, %v201
    %v218 = vadd.f32 %v174, %v204
    %v219 = vadd.f32 %v174, %v207
    %v220 = vadd.f32 %v174, %v210
    %v221 = vadd.f32 %v174, %v213
    %v222 = vtanh.pop %v214
    %v223 = vtanh.pop %v215
    %v224 = vtanh.pop %v216
    %v225 = vtanh.pop %v217
    %v226 = vtanh.pop %v218
    %v227 = vtanh.pop %v219
    %v228 = vtanh.pop %v220
    %v229 = vtanh.pop %v221
    %v230 = vmax.f32 %v222, %v226
    %v231 = vmax.f32 %v223, %v227
    %v232 = vmax.f32 %v224, %v228
    %v233 = vmax.f32 %v225, %v229
    %v234 = vmax.f32 %v230, %v231
    %v235 = vmax.f32 %v232, %v233
    %v236 = vmax.f32 %v234, %v235
    %v237 = vsub.f32 %v222, %v236
    %v238 = vsub.f32 %v223, %v236
    %v239 = vsub.f32 %v224, %v236
    %v240 = vsub.f32 %v225, %v236
    %v241 = vsub.f32 %v226, %v236
    %v242 = vsub.f32 %v227, %v236
    %v243 = vsub.f32 %v228, %v236
    %v244 = vsub.f32 %v229, %v236
    %v245 = vmul.f32 %v237, 1.442695
    %v246 = vpow.pop %v245
    %v247 = vmul.f32 %v238, 1.442695
    %v248 = vpow.pop %v247
    %v249 = vmul.f32 %v239, 1.442695
    %v250 = vpow.pop %v249
    %v251 = vmul.f32 %v240, 1.442695
    %v252 = vpow.pop %v251
    %v253 = vmul.f32 %v241, 1.442695
    %v254 = vpow.pop %v253
    %v255 = vmul.f32 %v242, 1.442695
    %v256 = vpow.pop %v255
    %v257 = vmul.f32 %v243, 1.442695
    %v258 = vpow.pop %v257
    %v259 = vmul.f32 %v244, 1.442695
    %v260 = vpow.pop %v259
    %v261 = vadd.f32 %v246, %v248
    %v262 = vadd.f32 %v261, %v250
    %v263 = vadd.f32 %v262, %v252
    %v264 = vadd.f32 %v263, %v254
    %v265 = vadd.f32 %v264, %v256
    %v266 = vadd.f32 %v265, %v258
    %v267 = vadd.f32 %v266, %v260
    %v268 = vrcp.pop %v267
    %v269 = vmul.f32 %v246, %v268
    %v270 = vmul.f32 %v248, %v268
    %v271 = vmul.f32 %v250, %v268
    %v272 = vmul.f32 %v252, %v268
    %v273 = vmul.f32 %v254, %v268
    %v274 = vmul.f32 %v256, %v268
    %v275 = vmul.f32 %v258, %v268
    %v276 = vmul.f32 %v260, %v268
    %v277 = vmul.f32 %v269, %v155
    %v278 = vmul.f32 %v270, %v156
    %v279 = vmul.f32 %v271, %v157
    %v280 = vmul.f32 %v272, %v158
    %v281 = vmul.f32 %v273, %v159
    %v282 = vmul.f32 %v274, %v160
    %v283 = vmul.f32 %v275, %v161
    %v284 = vmul.f32 %v276, %v162
    %v285 = vsel %vm171, %v277, 0.0
    %v286 = vsel %vm171, %v278, 0.0
    %v287 = vadd.f32 %v285, %v286
    %v288 = vsel %vm171, %v279, 0.0
    %v289 = vadd.f32 %v287, %v288
    %v290 = vsel %vm171, %v280, 0.0
    %v291 = vadd.f32 %v289, %v290
    %v292 = vsel %vm171, %v281, 0.0
    %v293 = vadd.f32 %v291, %v292
    %v294 = vsel %vm171, %v282, 0.0
    %v295 = vadd.f32 %v293, %v294
    %v296 = vsel %vm171, %v283, 0.0
    %v297 = vadd.f32 %v295, %v296
    %v298 = vsel %vm171, %v284, 0.0
    %v299 = vadd.f32 %v297, %v298
    %v300 = vld [vmem:[#allocation12] sm:$0xff]
    %v301 = vld [vmem:[#allocation12 + $0x8] sm:$0xff]
    %v302 = vld [vmem:[#allocation12 + $0x10] sm:$0xff]
    %v303 = vld [vmem:[#allocation12 + $0x18] sm:$0xff]
    %v304 = vld [vmem:[#allocation13] sm:$0xff]
    %v305 = vld [vmem:[#allocation13 + $0x8] sm:$0xff]
    %v306 = vld [vmem:[#allocation13 + $0x10] sm:$0xff]
    %v307 = vld [vmem:[#allocation13 + $0x18] sm:$0xff]
    %v309 = vsel %vm171, %v299, 0
    %311 = vmatprep.subr.mxu0 0.0
    %312 = vmatpush1.msra.mxu0 0.0
    %313 = vmatprep.subr.mxu0 0.0
    %314 = vmatpush1.msra.mxu0 0.0
    %315 = vmatprep.subr.mxu0 0.0
    %316 = vmatpush1.msra.mxu0 0.0
    %317 = vmatprep.subr.mxu0 0.0
    %318 = vmatpush1.msra.mxu0 0.0
    %319 = vmatprep.subr.mxu0 0.0
    %320 = vmatpush1.msra.mxu0 0.0
    %321 = vmatprep.subr.mxu0 0.0
    %322 = vmatpush1.msra.mxu0 0.0
    %323 = vmatprep.subr.mxu0 0.0
    %324 = vmatpush1.msra.mxu0 0.0
    %325 = vmatprep.subr.mxu0 0.0
    %326 = vmatpush1.msra.mxu0 0.0
    %327 = vmatprep.subr.mxu0 0.0
    %328 = vmatpush1.msra.mxu0 0.0
    %329 = vmatprep.subr.mxu0 0.0
    %330 = vmatpush1.msra.mxu0 0.0
    %331 = vmatprep.subr.mxu0 0.0
    %332 = vmatpush1.msra.mxu0 0.0
    %333 = vmatprep.subr.mxu0 0.0
    %334 = vmatpush1.msra.mxu0 0.0
    %335 = vmatprep.subr.mxu0 0.0
    %336 = vmatpush1.msra.mxu0 %v307
    %337 = vmatprep.subr.mxu0 0.0
    %338 = vmatpush1.msra.mxu0 %v306
    %339 = vmatprep.subr.mxu0 0.0
    %340 = vmatpush1.msra.mxu0 %v305
    %341 = vmatprep.subr.mxu0 0.0
    %342 = vmatpush1.msra.mxu0 %v304
    %343 = vmatprep.subr.mxu0 0.0
    %344 = vmatpush2.msra.mxu0 0.0
    %345 = vmatprep.subr.mxu0 0.0
    %346 = vmatpush2.msra.mxu0 0.0
    %347 = vmatprep.subr.mxu0 0.0
    %348 = vmatpush2.msra.mxu0 0.0
    %349 = vmatprep.subr.mxu0 0.0
    %350 = vmatpush2.msra.mxu0 0.0
    %351 = vmatprep.subr.mxu0 0.0
    %352 = vmatpush2.msra.mxu0 0.0
    %353 = vmatprep.subr.mxu0 0.0
    %354 = vmatpush2.msra.mxu0 0.0
    %355 = vmatprep.subr.mxu0 0.0
    %356 = vmatpush2.msra.mxu0 0.0
    %357 = vmatprep.subr.mxu0 0.0
    %358 = vmatpush2.msra.mxu0 0.0
    %359 = vmatprep.subr.mxu0 0.0
    %360 = vmatpush2.msra.mxu0 0.0
    %361 = vmatprep.subr.mxu0 0.0
    %362 = vmatpush2.msra.mxu0 0.0
    %363 = vmatprep.subr.mxu0 0.0
    %364 = vmatpush2.msra.mxu0 0.0
    %365 = vmatprep.subr.mxu0 0.0
    %366 = vmatpush2.msra.mxu0 0.0
    %367 = vmatprep.subr.mxu0 0.0
    %368 = vmatpush2.msra.mxu0 0.0
    %369 = vmatprep.subr.mxu0 0.0
    %370 = vmatpush2.msra.mxu0 0.0
    %371 = vmatprep.subr.mxu0 0.0
    %372 = vmatpush2.msra.mxu0 0.0
    %373 = vmatprep.subr.mxu0 0.0
    %374 = vmatpush2.msra.mxu0 0.0
    %375 = vmatprep.mubr.f32.mxu0 0.0
    %376 = vmatmul.mubr.f32.gmra.mxu0 %v309
    %v377 = vpop.f32.mrf.mxu0
    %v378 = vadd.f32 0.0, %v377
    %v379 = vpop.f32.mrf.mxu0
    %380 = vdwg.mxu0
    %v382 = vsel %vm171, %v154, 0
    %384 = vmatprep.subr.mxu0 0.0
    %385 = vmatpush1.msra.mxu0 0.0
    %386 = vmatprep.subr.mxu0 0.0
    %387 = vmatpush1.msra.mxu0 0.0
    %388 = vmatprep.subr.mxu0 0.0
    %389 = vmatpush1.msra.mxu0 0.0
    %390 = vmatprep.subr.mxu0 0.0
    %391 = vmatpush1.msra.mxu0 0.0
    %392 = vmatprep.subr.mxu0 0.0
    %393 = vmatpush1.msra.mxu0 0.0
    %394 = vmatprep.subr.mxu0 0.0
    %395 = vmatpush1.msra.mxu0 0.0
    %396 = vmatprep.subr.mxu0 0.0
    %397 = vmatpush1.msra.mxu0 0.0
    %398 = vmatprep.subr.mxu0 0.0
    %399 = vmatpush1.msra.mxu0 0.0
    %400 = vmatprep.subr.mxu0 0.0
    %401 = vmatpush1.msra.mxu0 0.0
    %402 = vmatprep.subr.mxu0 0.0
    %403 = vmatpush1.msra.mxu0 0.0
    %404 = vmatprep.subr.mxu0 0.0
    %405 = vmatpush1.msra.mxu0 0.0
    %406 = vmatprep.subr.mxu0 0.0
    %407 = vmatpush1.msra.mxu0 0.0
    %408 = vmatprep.subr.mxu0 0.0
    %409 = vmatpush1.msra.mxu0 %v303
    %410 = vmatprep.subr.mxu0 0.0
    %411 = vmatpush1.msra.mxu0 %v302
    %412 = vmatprep.subr.mxu0 0.0
    %413 = vmatpush1.msra.mxu0 %v301
    %414 = vmatprep.subr.mxu0 0.0
    %415 = vmatpush1.msra.mxu0 %v300
    %416 = vmatprep.subr.mxu0 0.0
    %417 = vmatpush2.msra.mxu0 0.0
    %418 = vmatprep.subr.mxu0 0.0
    %419 = vmatpush2.msra.mxu0 0.0
    %420 = vmatprep.subr.mxu0 0.0
    %421 = vmatpush2.msra.mxu0 0.0
    %422 = vmatprep.subr.mxu0 0.0
    %423 = vmatpush2.msra.mxu0 0.0
    %424 = vmatprep.subr.mxu0 0.0
    %425 = vmatpush2.msra.mxu0 0.0
    %426 = vmatprep.subr.mxu0 0.0
    %427 = vmatpush2.msra.mxu0 0.0
    %428 = vmatprep.subr.mxu0 0.0
    %429 = vmatpush2.msra.mxu0 0.0
    %430 = vmatprep.subr.mxu0 0.0
    %431 = vmatpush2.msra.mxu0 0.0
    %432 = vmatprep.subr.mxu0 0.0
    %433 = vmatpush2.msra.mxu0 0.0
    %434 = vmatprep.subr.mxu0 0.0
    %435 = vmatpush2.msra.mxu0 0.0
    %436 = vmatprep.subr.mxu0 0.0
    %437 = vmatpush2.msra.mxu0 0.0
    %438 = vmatprep.subr.mxu0 0.0
    %439 = vmatpush2.msra.mxu0 0.0
    %440 = vmatprep.subr.mxu0 0.0
    %441 = vmatpush2.msra.mxu0 0.0
    %442 = vmatprep.subr.mxu0 0.0
    %443 = vmatpush2.msra.mxu0 0.0
    %444 = vmatprep.subr.mxu0 0.0
    %445 = vmatpush2.msra.mxu0 0.0
    %446 = vmatprep.subr.mxu0 0.0
    %447 = vmatpush2.msra.mxu0 0.0
    %448 = vmatprep.mubr.f32.mxu0 0.0
    %449 = vmatmul.mubr.f32.gmra.mxu0 %v382
    %v450 = vpop.f32.mrf.mxu0
    %v451 = vadd.f32 %v378, %v450
    %v452 = vpop.f32.mrf.mxu0
    %453 = vdwg.mxu0
    %v454 = vtanh.pop %v451
    %455 = vst.msk [vmem:[#allocation19] sm:$0xff] %vm171, %v454
    %v456 = vld [vmem:[#allocation4] sm:$0xff]
    %v457 = vld [vmem:[#allocation4 + $0x8] sm:$0xff]
    %v458 = vld [vmem:[#allocation4 + $0x10] sm:$0xff]
    %v459 = vld [vmem:[#allocation4 + $0x18] sm:$0xff]
    %v460 = vld [vmem:[#allocation4 + $0x20] sm:$0xff]
    %v461 = vld [vmem:[#allocation4 + $0x28] sm:$0xff]
    %v462 = vld [vmem:[#allocation4 + $0x30] sm:$0xff]
    %v463 = vld [vmem:[#allocation4 + $0x38] sm:$0xff]
    %v464 = vpack.c.bf16 %v457, %v456
    %v465 = vpack.c.bf16 %v459, %v458
    %v466 = vpack.c.bf16 %v461, %v460
    %v467 = vpack.c.bf16 %v463, %v462
    %v468 = vld [vmem:[#allocation15] sm:$0xf]
    %v469 = vld [vmem:[#allocation15 + $0x4] sm:$0xf]
    %v470 = vld [vmem:[%s10] sm:$0x1]
    %v472 = vlaneseq
    %v473 = vshrl.u32 %v472, 7
    %v474 = vsub.s32 0, %v473
    %v475 = vrot.slane %v470, %v474
    %v479 = vunpack.c.l.b16 %v468
    %v480 = vunpack.c.l.b16 %v469
    %v481 = vpack.c.b16 %v480, %v479
    %vm483 = vcmask 130048
    %v485 = vsel %vm483, %v464, 0
    %v488 = vsel %vm483, %v465, 0
    %v491 = vsel %vm483, %v466, 0
    %v494 = vsel %vm483, %v467, 0
    %496 = vmatprep.subr.bf16.mxu0 0
    %497 = vmatpush1.bf16.msra.mxu0 0
    %498 = vmatprep.subr.bf16.mxu0 0
    %499 = vmatpush1.bf16.msra.mxu0 0
    %500 = vmatprep.subr.bf16.mxu0 0
    %501 = vmatpush1.bf16.msra.mxu0 0
    %502 = vmatprep.subr.bf16.mxu0 0
    %503 = vmatpush1.bf16.msra.mxu0 0
    %504 = vmatprep.subr.bf16.mxu0 0
    %505 = vmatpush1.bf16.msra.mxu0 0
    %506 = vmatprep.subr.bf16.mxu0 0
    %507 = vmatpush1.bf16.msra.mxu0 0
    %508 = vmatprep.subr.bf16.mxu0 0
    %509 = vmatpush1.bf16.msra.mxu0 0
    %510 = vmatprep.subr.bf16.mxu0 0
    %511 = vmatpush1.bf16.msra.mxu0 %v481
    %512 = vmatprep.subr.bf16.mxu0 0
    %513 = vmatpush2.bf16.msra.mxu0 0
    %514 = vmatprep.subr.bf16.mxu0 0
    %515 = vmatpush2.bf16.msra.mxu0 0
    %516 = vmatprep.subr.bf16.mxu0 0
    %517 = vmatpush2.bf16.msra.mxu0 0
    %518 = vmatprep.subr.bf16.mxu0 0
    %519 = vmatpush2.bf16.msra.mxu0 0
    %520 = vmatprep.subr.bf16.mxu0 0
    %521 = vmatpush2.bf16.msra.mxu0 0
    %522 = vmatprep.subr.bf16.mxu0 0
    %523 = vmatpush2.bf16.msra.mxu0 0
    %524 = vmatprep.subr.bf16.mxu0 0
    %525 = vmatpush2.bf16.msra.mxu0 0
    %526 = vmatprep.subr.bf16.mxu0 0
    %527 = vmatpush2.bf16.msra.mxu0 0
    %528 = vmatprep.mubr.bf16.mxu0 0
    %529 = vmatmul.mubr.bf16.gmra.mxu0 %v485
    %v530 = vpop.f32.mrf.mxu0
    %v531 = vadd.f32 %v475, %v530
    %v532 = vpop.f32.mrf.mxu0
    %v533 = vpop.f32.mrf.mxu0
    %v534 = vadd.f32 %v475, %v533
    %v535 = vpop.f32.mrf.mxu0
    %536 = vmatprep.mubr.bf16.mxu0 0
    %537 = vmatmul.mubr.bf16.gmra.mxu0 %v488
    %v538 = vpop.f32.mrf.mxu0
    %v539 = vadd.f32 %v475, %v538
    %v540 = vpop.f32.mrf.mxu0
    %v541 = vpop.f32.mrf.mxu0
    %v542 = vadd.f32 %v475, %v541
    %v543 = vpop.f32.mrf.mxu0
    %544 = vmatprep.mubr.bf16.mxu0 0
    %545 = vmatmul.mubr.bf16.gmra.mxu0 %v491
    %v546 = vpop.f32.mrf.mxu0
    %v547 = vadd.f32 %v475, %v546
    %v548 = vpop.f32.mrf.mxu0
    %v549 = vpop.f32.mrf.mxu0
    %v550 = vadd.f32 %v475, %v549
    %v551 = vpop.f32.mrf.mxu0
    %552 = vmatprep.mubr.bf16.mxu0 0
    %553 = vmatmul.mubr.bf16.gmra.mxu0 %v494
    %v554 = vpop.f32.mrf.mxu0
    %v555 = vadd.f32 %v475, %v554
    %v556 = vpop.f32.mrf.mxu0
    %v557 = vpop.f32.mrf.mxu0
    %v558 = vadd.f32 %v475, %v557
    %v559 = vpop.f32.mrf.mxu0
    %560 = vdwg.mxu0
    %561 = vst [vmem:[#allocation2] sm:$0xff] %v531
    %562 = vst [vmem:[#allocation2 + $0x8] sm:$0xff] %v534
    %563 = vst [vmem:[#allocation2 + $0x10] sm:$0xff] %v539
    %564 = vst [vmem:[#allocation2 + $0x18] sm:$0xff] %v542
    %565 = vst [vmem:[#allocation2 + $0x20] sm:$0xff] %v547
    %566 = vst [vmem:[#allocation2 + $0x28] sm:$0xff] %v550
    %567 = vst [vmem:[#allocation2 + $0x30] sm:$0xff] %v555
    %568 = vst [vmem:[#allocation2 + $0x38] sm:$0xff] %v558
    %v569 = vld [vmem:[#allocation16] sm:$0xff]
    %v570 = vld [vmem:[#allocation16 + $0x8] sm:$0xff]
    %v571 = vld [vmem:[#allocation16 + $0x10] sm:$0xff]
    %v572 = vld [vmem:[#allocation16 + $0x18] sm:$0xff]
    %v573 = vld [vmem:[#allocation9] sm:$0xff]
    %v574 = vld [vmem:[#allocation2] sm:$0xff]
    %v576 = vsel %vm171, %v454, 0
    %578 = vmatprep.subr.mxu0 0.0
    %579 = vmatpush1.msra.mxu0 0.0
    %580 = vmatprep.subr.mxu0 0.0
    %581 = vmatpush1.msra.mxu0 0.0
    %582 = vmatprep.subr.mxu0 0.0
    %583 = vmatpush1.msra.mxu0 0.0
    %584 = vmatprep.subr.mxu0 0.0
    %585 = vmatpush1.msra.mxu0 0.0
    %586 = vmatprep.subr.mxu0 0.0
    %587 = vmatpush1.msra.mxu0 0.0
    %588 = vmatprep.subr.mxu0 0.0
    %589 = vmatpush1.msra.mxu0 0.0
    %590 = vmatprep.subr.mxu0 0.0
    %591 = vmatpush1.msra.mxu0 0.0
    %592 = vmatprep.subr.mxu0 0.0
    %593 = vmatpush1.msra.mxu0 0.0
    %594 = vmatprep.subr.mxu0 0.0
    %595 = vmatpush1.msra.mxu0 0.0
    %596 = vmatprep.subr.mxu0 0.0
    %597 = vmatpush1.msra.mxu0 0.0
    %598 = vmatprep.subr.mxu0 0.0
    %599 = vmatpush1.msra.mxu0 0.0
    %600 = vmatprep.subr.mxu0 0.0
    %601 = vmatpush1.msra.mxu0 0.0
    %602 = vmatprep.subr.mxu0 0.0
    %603 = vmatpush1.msra.mxu0 %v572
    %604 = vmatprep.subr.mxu0 0.0
    %605 = vmatpush1.msra.mxu0 %v571
    %606 = vmatprep.subr.mxu0 0.0
    %607 = vmatpush1.msra.mxu0 %v570
    %608 = vmatprep.subr.mxu0 0.0
    %609 = vmatpush1.msra.mxu0 %v569
    %610 = vmatprep.subr.mxu0 0.0
    %611 = vmatpush2.msra.mxu0 0.0
    %612 = vmatprep.subr.mxu0 0.0
    %613 = vmatpush2.msra.mxu0 0.0
    %614 = vmatprep.subr.mxu0 0.0
    %615 = vmatpush2.msra.mxu0 0.0
    %616 = vmatprep.subr.mxu0 0.0
    %617 = vmatpush2.msra.mxu0 0.0
    %618 = vmatprep.subr.mxu0 0.0
    %619 = vmatpush2.msra.mxu0 0.0
    %620 = vmatprep.subr.mxu0 0.0
    %621 = vmatpush2.msra.mxu0 0.0
    %622 = vmatprep.subr.mxu0 0.0
    %623 = vmatpush2.msra.mxu0 0.0
    %624 = vmatprep.subr.mxu0 0.0
    %625 = vmatpush2.msra.mxu0 0.0
    %626 = vmatprep.subr.mxu0 0.0
    %627 = vmatpush2.msra.mxu0 0.0
    %628 = vmatprep.subr.mxu0 0.0
    %629 = vmatpush2.msra.mxu0 0.0
    %630 = vmatprep.subr.mxu0 0.0
    %631 = vmatpush2.msra.mxu0 0.0
    %632 = vmatprep.subr.mxu0 0.0
    %633 = vmatpush2.msra.mxu0 0.0
    %634 = vmatprep.subr.mxu0 0.0
    %635 = vmatpush2.msra.mxu0 0.0
    %636 = vmatprep.subr.mxu0 0.0
    %637 = vmatpush2.msra.mxu0 0.0
    %638 = vmatprep.subr.mxu0 0.0
    %639 = vmatpush2.msra.mxu0 0.0
    %640 = vmatprep.subr.mxu0 0.0
    %641 = vmatpush2.msra.mxu0 0.0
    %642 = vmatprep.mubr.f32.mxu0 0.0
    %643 = vmatmul.mubr.f32.gmra.mxu0 %v576
    %v644 = vpop.f32.mrf.mxu0
    %v645 = vadd.f32 0.0, %v644
    %v646 = vpop.f32.mrf.mxu0
    %647 = vdwg.mxu0
    %v648 = vadd.f32 %v574, %v645
    %v649 = vxor.u32 %v648, 2147483648
    %v650 = vmul.f32 %v649, 1.442695
    %v651 = vpow.pop %v650
    %v652 = vadd.f32 %v651, 1.0
    %v653 = vrcp.pop %v652
    %v654 = vmul.f32 1.0, %v653
    %v655 = vtanh.pop %v648
    %657 = vrot.lane.b32.xlu0 %v573, 32
    %v658 = vpop.permute.xlu0 %657
    %v660 = vmul.f32 %v654, %v658
    %662 = vrot.lane.b32.xlu0 %v655, 32
    %v663 = vpop.permute.xlu0 %662
    %v665 = vmul.f32 %v654, %v663
    %667 = vrot.lane.b32.xlu0 %v665, 32
    %v668 = vpop.permute.xlu0 %667
    %v670 = vadd.f32 %v660, %v668
    %v671 = vtanh.pop %v670
    %673 = vrot.lane.b32.xlu0 %v671, 32
    %v674 = vpop.permute.xlu0 %673
    %v676 = vmul.f32 %v654, %v674
    %678 = vrot.lane.b32.xlu0 %v676, 64
    %v679 = vpop.permute.xlu0 %678
    %681 = vst.msk [vmem:[#allocation3] sm:$0xff] %vm171, %v679
    %s682 = scalar_lea.vmem [#allocation2], 8
    %v683 = vld [vmem:[%s682] sm:$0xff]
    %v684 = vsel %vm171, %v679, 0
    %686 = vmatprep.subr.mxu0 0.0
    %687 = vmatpush1.msra.mxu0 0.0
    %688 = vmatprep.subr.mxu0 0.0
    %689 = vmatpush1.msra.mxu0 0.0
    %690 = vmatprep.subr.mxu0 0.0
    %691 = vmatpush1.msra.mxu0 0.0
    %692 = vmatprep.subr.mxu0 0.0
    %693 = vmatpush1.msra.mxu0 0.0
    %694 = vmatprep.subr.mxu0 0.0
    %695 = vmatpush1.msra.mxu0 0.0
    %696 = vmatprep.subr.mxu0 0.0
    %697 = vmatpush1.msra.mxu0 0.0
    %698 = vmatprep.subr.mxu0 0.0
    %699 = vmatpush1.msra.mxu0 0.0
    %700 = vmatprep.subr.mxu0 0.0
    %701 = vmatpush1.msra.mxu0 0.0
    %702 = vmatprep.subr.mxu0 0.0
    %703 = vmatpush1.msra.mxu0 0.0
    %704 = vmatprep.subr.mxu0 0.0
    %705 = vmatpush1.msra.mxu0 0.0
    %706 = vmatprep.subr.mxu0 0.0
    %707 = vmatpush1.msra.mxu0 0.0
    %708 = vmatprep.subr.mxu0 0.0
    %709 = vmatpush1.msra.mxu0 0.0
    %710 = vmatprep.subr.mxu0 0.0
    %711 = vmatpush1.msra.mxu0 %v572
    %712 = vmatprep.subr.mxu0 0.0
    %713 = vmatpush1.msra.mxu0 %v571
    %714 = vmatprep.subr.mxu0 0.0
    %715 = vmatpush1.msra.mxu0 %v570
    %716 = vmatprep.subr.mxu0 0.0
    %717 = vmatpush1.msra.mxu0 %v569
    %718 = vmatprep.subr.mxu0 0.0
    %719 = vmatpush2.msra.mxu0 0.0
    %720 = vmatprep.subr.mxu0 0.0
    %721 = vmatpush2.msra.mxu0 0.0
    %722 = vmatprep.subr.mxu0 0.0
    %723 = vmatpush2.msra.mxu0 0.0
    %724 = vmatprep.subr.mxu0 0.0
    %725 = vmatpush2.msra.mxu0 0.0
    %726 = vmatprep.subr.mxu0 0.0
    %727 = vmatpush2.msra.mxu0 0.0
    %728 = vmatprep.subr.mxu0 0.0
    %729 = vmatpush2.msra.mxu0 0.0
    %730 = vmatprep.subr.mxu0 0.0
    %731 = vmatpush2.msra.mxu0 0.0
    %732 = vmatprep.subr.mxu0 0.0
    %733 = vmatpush2.msra.mxu0 0.0
    %734 = vmatprep.subr.mxu0 0.0
    %735 = vmatpush2.msra.mxu0 0.0
    %736 = vmatprep.subr.mxu0 0.0
    %737 = vmatpush2.msra.mxu0 0.0
    %738 = vmatprep.subr.mxu0 0.0
    %739 = vmatpush2.msra.mxu0 0.0
    %740 = vmatprep.subr.mxu0 0.0
    %741 = vmatpush2.msra.mxu0 0.0
    %742 = vmatprep.subr.mxu0 0.0
    %743 = vmatpush2.msra.mxu0 0.0
    %744 = vmatprep.subr.mxu0 0.0
    %745 = vmatpush2.msra.mxu0 0.0
    %746 = vmatprep.subr.mxu0 0.0
    %747 = vmatpush2.msra.mxu0 0.0
    %748 = vmatprep.subr.mxu0 0.0
    %749 = vmatpush2.msra.mxu0 0.0
    %750 = vmatprep.mubr.f32.mxu0 0.0
    %751 = vmatmul.mubr.f32.gmra.mxu0 %v684
    %v752 = vpop.f32.mrf.mxu0
    %v753 = vadd.f32 0.0, %v752
    %v754 = vpop.f32.mrf.mxu0
    %755 = vdwg.mxu0
    %v756 = vadd.f32 %v683, %v753
    %v757 = vxor.u32 %v756, 2147483648
    %v758 = vmul.f32 %v757, 1.442695
    %v759 = vpow.pop %v758
    %v760 = vadd.f32 %v759, 1.0
    %v761 = vrcp.pop %v760
    %v762 = vmul.f32 1.0, %v761
    %v763 = vtanh.pop %v756
    %v764 = vmul.f32 %v762, %v670
    %766 = vrot.lane.b32.xlu0 %v763, 32
    %v767 = vpop.permute.xlu0 %766
    %v769 = vmul.f32 %v762, %v767
    %771 = vrot.lane.b32.xlu0 %v769, 32
    %v772 = vpop.permute.xlu0 %771
    %v774 = vadd.f32 %v764, %v772
    %v775 = vtanh.pop %v774
    %777 = vrot.lane.b32.xlu0 %v775, 32
    %v778 = vpop.permute.xlu0 %777
    %v780 = vmul.f32 %v762, %v778
    %782 = vrot.lane.b32.xlu0 %v780, 64
    %v783 = vpop.permute.xlu0 %782
    %s785 = scalar_lea.vmem [#allocation3], 8
    %786 = vst.msk [vmem:[%s785] sm:$0xff] %vm171, %v783
    %s787 = scalar_lea.vmem [#allocation2], 16
    %v788 = vld [vmem:[%s787] sm:$0xff]
    %v789 = vsel %vm171, %v783, 0
    %791 = vmatprep.subr.mxu0 0.0
    %792 = vmatpush1.msra.mxu0 0.0
    %793 = vmatprep.subr.mxu0 0.0
    %794 = vmatpush1.msra.mxu0 0.0
    %795 = vmatprep.subr.mxu0 0.0
    %796 = vmatpush1.msra.mxu0 0.0
    %797 = vmatprep.subr.mxu0 0.0
    %798 = vmatpush1.msra.mxu0 0.0
    %799 = vmatprep.subr.mxu0 0.0
    %800 = vmatpush1.msra.mxu0 0.0
    %801 = vmatprep.subr.mxu0 0.0
    %802 = vmatpush1.msra.mxu0 0.0
    %803 = vmatprep.subr.mxu0 0.0
    %804 = vmatpush1.msra.mxu0 0.0
    %805 = vmatprep.subr.mxu0 0.0
    %806 = vmatpush1.msra.mxu0 0.0
    %807 = vmatprep.subr.mxu0 0.0
    %808 = vmatpush1.msra.mxu0 0.0
    %809 = vmatprep.subr.mxu0 0.0
    %810 = vmatpush1.msra.mxu0 0.0
    %811 = vmatprep.subr.mxu0 0.0
    %812 = vmatpush1.msra.mxu0 0.0
    %813 = vmatprep.subr.mxu0 0.0
    %814 = vmatpush1.msra.mxu0 0.0
    %815 = vmatprep.subr.mxu0 0.0
    %816 = vmatpush1.msra.mxu0 %v572
    %817 = vmatprep.subr.mxu0 0.0
    %818 = vmatpush1.msra.mxu0 %v571
    %819 = vmatprep.subr.mxu0 0.0
    %820 = vmatpush1.msra.mxu0 %v570
    %821 = vmatprep.subr.mxu0 0.0
    %822 = vmatpush1.msra.mxu0 %v569
    %823 = vmatprep.subr.mxu0 0.0
    %824 = vmatpush2.msra.mxu0 0.0
    %825 = vmatprep.subr.mxu0 0.0
    %826 = vmatpush2.msra.mxu0 0.0
    %827 = vmatprep.subr.mxu0 0.0
    %828 = vmatpush2.msra.mxu0 0.0
    %829 = vmatprep.subr.mxu0 0.0
    %830 = vmatpush2.msra.mxu0 0.0
    %831 = vmatprep.subr.mxu0 0.0
    %832 = vmatpush2.msra.mxu0 0.0
    %833 = vmatprep.subr.mxu0 0.0
    %834 = vmatpush2.msra.mxu0 0.0
    %835 = vmatprep.subr.mxu0 0.0
    %836 = vmatpush2.msra.mxu0 0.0
    %837 = vmatprep.subr.mxu0 0.0
    %838 = vmatpush2.msra.mxu0 0.0
    %839 = vmatprep.subr.mxu0 0.0
    %840 = vmatpush2.msra.mxu0 0.0
    %841 = vmatprep.subr.mxu0 0.0
    %842 = vmatpush2.msra.mxu0 0.0
    %843 = vmatprep.subr.mxu0 0.0
    %844 = vmatpush2.msra.mxu0 0.0
    %845 = vmatprep.subr.mxu0 0.0
    %846 = vmatpush2.msra.mxu0 0.0
    %847 = vmatprep.subr.mxu0 0.0
    %848 = vmatpush2.msra.mxu0 0.0
    %849 = vmatprep.subr.mxu0 0.0
    %850 = vmatpush2.msra.mxu0 0.0
    %851 = vmatprep.subr.mxu0 0.0
    %852 = vmatpush2.msra.mxu0 0.0
    %853 = vmatprep.subr.mxu0 0.0
    %854 = vmatpush2.msra.mxu0 0.0
    %855 = vmatprep.mubr.f32.mxu0 0.0
    %856 = vmatmul.mubr.f32.gmra.mxu0 %v789
    %v857 = vpop.f32.mrf.mxu0
    %v858 = vadd.f32 0.0, %v857
    %v859 = vpop.f32.mrf.mxu0
    %860 = vdwg.mxu0
    %v861 = vadd.f32 %v788, %v858
    %v862 = vxor.u32 %v861, 2147483648
    %v863 = vmul.f32 %v862, 1.442695
    %v864 = vpow.pop %v863
    %v865 = vadd.f32 %v864, 1.0
    %v866 = vrcp.pop %v865
    %v867 = vmul.f32 1.0, %v866
    %v868 = vtanh.pop %v861
    %v869 = vmul.f32 %v867, %v774
    %871 = vrot.lane.b32.xlu0 %v868, 32
    %v872 = vpop.permute.xlu0 %871
    %v874 = vmul.f32 %v867, %v872
    %876 = vrot.lane.b32.xlu0 %v874, 32
    %v877 = vpop.permute.xlu0 %876
    %v879 = vadd.f32 %v869, %v877
    %v880 = vtanh.pop %v879
    %882 = vrot.lane.b32.xlu0 %v880, 32
    %v883 = vpop.permute.xlu0 %882
    %v885 = vmul.f32 %v867, %v883
    %887 = vrot.lane.b32.xlu0 %v885, 64
    %v888 = vpop.permute.xlu0 %887
    %s890 = scalar_lea.vmem [#allocation3], 16
    %891 = vst.msk [vmem:[%s890] sm:$0xff] %vm171, %v888
    %s892 = scalar_lea.vmem [#allocation2], 24
    %v893 = vld [vmem:[%s892] sm:$0xff]
    %v894 = vsel %vm171, %v888, 0
    %896 = vmatprep.subr.mxu0 0.0
    %897 = vmatpush1.msra.mxu0 0.0
    %898 = vmatprep.subr.mxu0 0.0
    %899 = vmatpush1.msra.mxu0 0.0
    %900 = vmatprep.subr.mxu0 0.0
    %901 = vmatpush1.msra.mxu0 0.0
    %902 = vmatprep.subr.mxu0 0.0
    %903 = vmatpush1.msra.mxu0 0.0
    %904 = vmatprep.subr.mxu0 0.0
    %905 = vmatpush1.msra.mxu0 0.0
    %906 = vmatprep.subr.mxu0 0.0
    %907 = vmatpush1.msra.mxu0 0.0
    %908 = vmatprep.subr.mxu0 0.0
    %909 = vmatpush1.msra.mxu0 0.0
    %910 = vmatprep.subr.mxu0 0.0
    %911 = vmatpush1.msra.mxu0 0.0
    %912 = vmatprep.subr.mxu0 0.0
    %913 = vmatpush1.msra.mxu0 0.0
    %914 = vmatprep.subr.mxu0 0.0
    %915 = vmatpush1.msra.mxu0 0.0
    %916 = vmatprep.subr.mxu0 0.0
    %917 = vmatpush1.msra.mxu0 0.0
    %918 = vmatprep.subr.mxu0 0.0
    %919 = vmatpush1.msra.mxu0 0.0
    %920 = vmatprep.subr.mxu0 0.0
    %921 = vmatpush1.msra.mxu0 %v572
    %922 = vmatprep.subr.mxu0 0.0
    %923 = vmatpush1.msra.mxu0 %v571
    %924 = vmatprep.subr.mxu0 0.0
    %925 = vmatpush1.msra.mxu0 %v570
    %926 = vmatprep.subr.mxu0 0.0
    %927 = vmatpush1.msra.mxu0 %v569
    %928 = vmatprep.subr.mxu0 0.0
    %929 = vmatpush2.msra.mxu0 0.0
    %930 = vmatprep.subr.mxu0 0.0
    %931 = vmatpush2.msra.mxu0 0.0
    %932 = vmatprep.subr.mxu0 0.0
    %933 = vmatpush2.msra.mxu0 0.0
    %934 = vmatprep.subr.mxu0 0.0
    %935 = vmatpush2.msra.mxu0 0.0
    %936 = vmatprep.subr.mxu0 0.0
    %937 = vmatpush2.msra.mxu0 0.0
    %938 = vmatprep.subr.mxu0 0.0
    %939 = vmatpush2.msra.mxu0 0.0
    %940 = vmatprep.subr.mxu0 0.0
    %941 = vmatpush2.msra.mxu0 0.0
    %942 = vmatprep.subr.mxu0 0.0
    %943 = vmatpush2.msra.mxu0 0.0
    %944 = vmatprep.subr.mxu0 0.0
    %945 = vmatpush2.msra.mxu0 0.0
    %946 = vmatprep.subr.mxu0 0.0
    %947 = vmatpush2.msra.mxu0 0.0
    %948 = vmatprep.subr.mxu0 0.0
    %949 = vmatpush2.msra.mxu0 0.0
    %950 = vmatprep.subr.mxu0 0.0
    %951 = vmatpush2.msra.mxu0 0.0
    %952 = vmatprep.subr.mxu0 0.0
    %953 = vmatpush2.msra.mxu0 0.0
    %954 = vmatprep.subr.mxu0 0.0
    %955 = vmatpush2.msra.mxu0 0.0
    %956 = vmatprep.subr.mxu0 0.0
    %957 = vmatpush2.msra.mxu0 0.0
    %958 = vmatprep.subr.mxu0 0.0
    %959 = vmatpush2.msra.mxu0 0.0
    %960 = vmatprep.mubr.f32.mxu0 0.0
    %961 = vmatmul.mubr.f32.gmra.mxu0 %v894
    %v962 = vpop.f32.mrf.mxu0
    %v963 = vadd.f32 0.0, %v962
    %v964 = vpop.f32.mrf.mxu0
    %965 = vdwg.mxu0
    %v966 = vadd.f32 %v893, %v963
    %v967 = vxor.u32 %v966, 2147483648
    %v968 = vmul.f32 %v967, 1.442695
    %v969 = vpow.pop %v968
    %v970 = vadd.f32 %v969, 1.0
    %v971 = vrcp.pop %v970
    %v972 = vmul.f32 1.0, %v971
    %v973 = vtanh.pop %v966
    %v974 = vmul.f32 %v972, %v879
    %976 = vrot.lane.b32.xlu0 %v973, 32
    %v977 = vpop.permute.xlu0 %976
    %v979 = vmul.f32 %v972, %v977
    %981 = vrot.lane.b32.xlu0 %v979, 32
    %v982 = vpop.permute.xlu0 %981
    %v984 = vadd.f32 %v974, %v982
    %v985 = vtanh.pop %v984
    %987 = vrot.lane.b32.xlu0 %v985, 32
    %v988 = vpop.permute.xlu0 %987
    %v990 = vmul.f32 %v972, %v988
    %992 = vrot.lane.b32.xlu0 %v990, 64
    %v993 = vpop.permute.xlu0 %992
    %s995 = scalar_lea.vmem [#allocation3], 24
    %996 = vst.msk [vmem:[%s995] sm:$0xff] %vm171, %v993
    %s997 = scalar_lea.vmem [#allocation2], 32
    %v998 = vld [vmem:[%s997] sm:$0xff]
    %v999 = vsel %vm171, %v993, 0
    %1001 = vmatprep.subr.mxu0 0.0
    %1002 = vmatpush1.msra.mxu0 0.0
    %1003 = vmatprep.subr.mxu0 0.0
    %1004 = vmatpush1.msra.mxu0 0.0
    %1005 = vmatprep.subr.mxu0 0.0
    %1006 = vmatpush1.msra.mxu0 0.0
    %1007 = vmatprep.subr.mxu0 0.0
    %1008 = vmatpush1.msra.mxu0 0.0
    %1009 = vmatprep.subr.mxu0 0.0
    %1010 = vmatpush1.msra.mxu0 0.0
    %1011 = vmatprep.subr.mxu0 0.0
    %1012 = vmatpush1.msra.mxu0 0.0
    %1013 = vmatprep.subr.mxu0 0.0
    %1014 = vmatpush1.msra.mxu0 0.0
    %1015 = vmatprep.subr.mxu0 0.0
    %1016 = vmatpush1.msra.mxu0 0.0
    %1017 = vmatprep.subr.mxu0 0.0
    %1018 = vmatpush1.msra.mxu0 0.0
    %1019 = vmatprep.subr.mxu0 0.0
    %1020 = vmatpush1.msra.mxu0 0.0
    %1021 = vmatprep.subr.mxu0 0.0
    %1022 = vmatpush1.msra.mxu0 0.0
    %1023 = vmatprep.subr.mxu0 0.0
    %1024 = vmatpush1.msra.mxu0 0.0
    %1025 = vmatprep.subr.mxu0 0.0
    %1026 = vmatpush1.msra.mxu0 %v572
    %1027 = vmatprep.subr.mxu0 0.0
    %1028 = vmatpush1.msra.mxu0 %v571
    %1029 = vmatprep.subr.mxu0 0.0
    %1030 = vmatpush1.msra.mxu0 %v570
    %1031 = vmatprep.subr.mxu0 0.0
    %1032 = vmatpush1.msra.mxu0 %v569
    %1033 = vmatprep.subr.mxu0 0.0
    %1034 = vmatpush2.msra.mxu0 0.0
    %1035 = vmatprep.subr.mxu0 0.0
    %1036 = vmatpush2.msra.mxu0 0.0
    %1037 = vmatprep.subr.mxu0 0.0
    %1038 = vmatpush2.msra.mxu0 0.0
    %1039 = vmatprep.subr.mxu0 0.0
    %1040 = vmatpush2.msra.mxu0 0.0
    %1041 = vmatprep.subr.mxu0 0.0
    %1042 = vmatpush2.msra.mxu0 0.0
    %1043 = vmatprep.subr.mxu0 0.0
    %1044 = vmatpush2.msra.mxu0 0.0
    %1045 = vmatprep.subr.mxu0 0.0
    %1046 = vmatpush2.msra.mxu0 0.0
    %1047 = vmatprep.subr.mxu0 0.0
    %1048 = vmatpush2.msra.mxu0 0.0
    %1049 = vmatprep.subr.mxu0 0.0
    %1050 = vmatpush2.msra.mxu0 0.0
    %1051 = vmatprep.subr.mxu0 0.0
    %1052 = vmatpush2.msra.mxu0 0.0
    %1053 = vmatprep.subr.mxu0 0.0
    %1054 = vmatpush2.msra.mxu0 0.0
    %1055 = vmatprep.subr.mxu0 0.0
    %1056 = vmatpush2.msra.mxu0 0.0
    %1057 = vmatprep.subr.mxu0 0.0
    %1058 = vmatpush2.msra.mxu0 0.0
    %1059 = vmatprep.subr.mxu0 0.0
    %1060 = vmatpush2.msra.mxu0 0.0
    %1061 = vmatprep.subr.mxu0 0.0
    %1062 = vmatpush2.msra.mxu0 0.0
    %1063 = vmatprep.subr.mxu0 0.0
    %1064 = vmatpush2.msra.mxu0 0.0
    %1065 = vmatprep.mubr.f32.mxu0 0.0
    %1066 = vmatmul.mubr.f32.gmra.mxu0 %v999
    %v1067 = vpop.f32.mrf.mxu0
    %v1068 = vadd.f32 0.0, %v1067
    %v1069 = vpop.f32.mrf.mxu0
    %1070 = vdwg.mxu0
    %v1071 = vadd.f32 %v998, %v1068
    %v1072 = vxor.u32 %v1071, 2147483648
    %v1073 = vmul.f32 %v1072, 1.442695
    %v1074 = vpow.pop %v1073
    %v1075 = vadd.f32 %v1074, 1.0
    %v1076 = vrcp.pop %v1075
    %v1077 = vmul.f32 1.0, %v1076
    %v1078 = vtanh.pop %v1071
    %v1079 = vmul.f32 %v1077, %v984
    %1081 = vrot.lane.b32.xlu0 %v1078, 32
    %v1082 = vpop.permute.xlu0 %1081
    %v1084 = vmul.f32 %v1077, %v1082
    %1086 = vrot.lane.b32.xlu0 %v1084, 32
    %v1087 = vpop.permute.xlu0 %1086
    %v1089 = vadd.f32 %v1079, %v1087
    %v1090 = vtanh.pop %v1089
    %1092 = vrot.lane.b32.xlu0 %v1090, 32
    %v1093 = vpop.permute.xlu0 %1092
    %v1095 = vmul.f32 %v1077, %v1093
    %1097 = vrot.lane.b32.xlu0 %v1095, 64
    %v1098 = vpop.permute.xlu0 %1097
    %s1100 = scalar_lea.vmem [#allocation3], 32
    %1101 = vst.msk [vmem:[%s1100] sm:$0xff] %vm171, %v1098
    %s1102 = scalar_lea.vmem [#allocation2], 40
    %v1103 = vld [vmem:[%s1102] sm:$0xff]
    %v1104 = vsel %vm171, %v1098, 0
    %1106 = vmatprep.subr.mxu0 0.0
    %1107 = vmatpush1.msra.mxu0 0.0
    %1108 = vmatprep.subr.mxu0 0.0
    %1109 = vmatpush1.msra.mxu0 0.0
    %1110 = vmatprep.subr.mxu0 0.0
    %1111 = vmatpush1.msra.mxu0 0.0
    %1112 = vmatprep.subr.mxu0 0.0
    %1113 = vmatpush1.msra.mxu0 0.0
    %1114 = vmatprep.subr.mxu0 0.0
    %1115 = vmatpush1.msra.mxu0 0.0
    %1116 = vmatprep.subr.mxu0 0.0
    %1117 = vmatpush1.msra.mxu0 0.0
    %1118 = vmatprep.subr.mxu0 0.0
    %1119 = vmatpush1.msra.mxu0 0.0
    %1120 = vmatprep.subr.mxu0 0.0
    %1121 = vmatpush1.msra.mxu0 0.0
    %1122 = vmatprep.subr.mxu0 0.0
    %1123 = vmatpush1.msra.mxu0 0.0
    %1124 = vmatprep.subr.mxu0 0.0
    %1125 = vmatpush1.msra.mxu0 0.0
    %1126 = vmatprep.subr.mxu0 0.0
    %1127 = vmatpush1.msra.mxu0 0.0
    %1128 = vmatprep.subr.mxu0 0.0
    %1129 = vmatpush1.msra.mxu0 0.0
    %1130 = vmatprep.subr.mxu0 0.0
    %1131 = vmatpush1.msra.mxu0 %v572
    %1132 = vmatprep.subr.mxu0 0.0
    %1133 = vmatpush1.msra.mxu0 %v571
    %1134 = vmatprep.subr.mxu0 0.0
    %1135 = vmatpush1.msra.mxu0 %v570
    %1136 = vmatprep.subr.mxu0 0.0
    %1137 = vmatpush1.msra.mxu0 %v569
    %1138 = vmatprep.subr.mxu0 0.0
    %1139 = vmatpush2.msra.mxu0 0.0
    %1140 = vmatprep.subr.mxu0 0.0
    %1141 = vmatpush2.msra.mxu0 0.0
    %1142 = vmatprep.subr.mxu0 0.0
    %1143 = vmatpush2.msra.mxu0 0.0
    %1144 = vmatprep.subr.mxu0 0.0
    %1145 = vmatpush2.msra.mxu0 0.0
    %1146 = vmatprep.subr.mxu0 0.0
    %1147 = vmatpush2.msra.mxu0 0.0
    %1148 = vmatprep.subr.mxu0 0.0
    %1149 = vmatpush2.msra.mxu0 0.0
    %1150 = vmatprep.subr.mxu0 0.0
    %1151 = vmatpush2.msra.mxu0 0.0
    %1152 = vmatprep.subr.mxu0 0.0
    %1153 = vmatpush2.msra.mxu0 0.0
    %1154 = vmatprep.subr.mxu0 0.0
    %1155 = vmatpush2.msra.mxu0 0.0
    %1156 = vmatprep.subr.mxu0 0.0
    %1157 = vmatpush2.msra.mxu0 0.0
    %1158 = vmatprep.subr.mxu0 0.0
    %1159 = vmatpush2.msra.mxu0 0.0
    %1160 = vmatprep.subr.mxu0 0.0
    %1161 = vmatpush2.msra.mxu0 0.0
    %1162 = vmatprep.subr.mxu0 0.0
    %1163 = vmatpush2.msra.mxu0 0.0
    %1164 = vmatprep.subr.mxu0 0.0
    %1165 = vmatpush2.msra.mxu0 0.0
    %1166 = vmatprep.subr.mxu0 0.0
    %1167 = vmatpush2.msra.mxu0 0.0
    %1168 = vmatprep.subr.mxu0 0.0
    %1169 = vmatpush2.msra.mxu0 0.0
    %1170 = vmatprep.mubr.f32.mxu0 0.0
    %1171 = vmatmul.mubr.f32.gmra.mxu0 %v1104
    %v1172 = vpop.f32.mrf.mxu0
    %v1173 = vadd.f32 0.0, %v1172
    %v1174 = vpop.f32.mrf.mxu0
    %1175 = vdwg.mxu0
    %v1176 = vadd.f32 %v1103, %v1173
    %v1177 = vxor.u32 %v1176, 2147483648
    %v1178 = vmul.f32 %v1177, 1.442695
    %v1179 = vpow.pop %v1178
    %v1180 = vadd.f32 %v1179, 1.0
    %v1181 = vrcp.pop %v1180
    %v1182 = vmul.f32 1.0, %v1181
    %v1183 = vtanh.pop %v1176
    %v1184 = vmul.f32 %v1182, %v1089
    %1186 = vrot.lane.b32.xlu0 %v1183, 32
    %v1187 = vpop.permute.xlu0 %1186
    %v1189 = vmul.f32 %v1182, %v1187
    %1191 = vrot.lane.b32.xlu0 %v1189, 32
    %v1192 = vpop.permute.xlu0 %1191
    %v1194 = vadd.f32 %v1184, %v1192
    %v1195 = vtanh.pop %v1194
    %1197 = vrot.lane.b32.xlu0 %v1195, 32
    %v1198 = vpop.permute.xlu0 %1197
    %v1200 = vmul.f32 %v1182, %v1198
    %1202 = vrot.lane.b32.xlu0 %v1200, 64
    %v1203 = vpop.permute.xlu0 %1202
    %s1205 = scalar_lea.vmem [#allocation3], 40
    %1206 = vst.msk [vmem:[%s1205] sm:$0xff] %vm171, %v1203
    %s1207 = scalar_lea.vmem [#allocation2], 48
    %v1208 = vld [vmem:[%s1207] sm:$0xff]
    %v1209 = vsel %vm171, %v1203, 0
    %1211 = vmatprep.subr.mxu0 0.0
    %1212 = vmatpush1.msra.mxu0 0.0
    %1213 = vmatprep.subr.mxu0 0.0
    %1214 = vmatpush1.msra.mxu0 0.0
    %1215 = vmatprep.subr.mxu0 0.0
    %1216 = vmatpush1.msra.mxu0 0.0
    %1217 = vmatprep.subr.mxu0 0.0
    %1218 = vmatpush1.msra.mxu0 0.0
    %1219 = vmatprep.subr.mxu0 0.0
    %1220 = vmatpush1.msra.mxu0 0.0
    %1221 = vmatprep.subr.mxu0 0.0
    %1222 = vmatpush1.msra.mxu0 0.0
    %1223 = vmatprep.subr.mxu0 0.0
    %1224 = vmatpush1.msra.mxu0 0.0
    %1225 = vmatprep.subr.mxu0 0.0
    %1226 = vmatpush1.msra.mxu0 0.0
    %1227 = vmatprep.subr.mxu0 0.0
    %1228 = vmatpush1.msra.mxu0 0.0
    %1229 = vmatprep.subr.mxu0 0.0
    %1230 = vmatpush1.msra.mxu0 0.0
    %1231 = vmatprep.subr.mxu0 0.0
    %1232 = vmatpush1.msra.mxu0 0.0
    %1233 = vmatprep.subr.mxu0 0.0
    %1234 = vmatpush1.msra.mxu0 0.0
    %1235 = vmatprep.subr.mxu0 0.0
    %1236 = vmatpush1.msra.mxu0 %v572
    %1237 = vmatprep.subr.mxu0 0.0
    %1238 = vmatpush1.msra.mxu0 %v571
    %1239 = vmatprep.subr.mxu0 0.0
    %1240 = vmatpush1.msra.mxu0 %v570
    %1241 = vmatprep.subr.mxu0 0.0
    %1242 = vmatpush1.msra.mxu0 %v569
    %1243 = vmatprep.subr.mxu0 0.0
    %1244 = vmatpush2.msra.mxu0 0.0
    %1245 = vmatprep.subr.mxu0 0.0
    %1246 = vmatpush2.msra.mxu0 0.0
    %1247 = vmatprep.subr.mxu0 0.0
    %1248 = vmatpush2.msra.mxu0 0.0
    %1249 = vmatprep.subr.mxu0 0.0
    %1250 = vmatpush2.msra.mxu0 0.0
    %1251 = vmatprep.subr.mxu0 0.0
    %1252 = vmatpush2.msra.mxu0 0.0
    %1253 = vmatprep.subr.mxu0 0.0
    %1254 = vmatpush2.msra.mxu0 0.0
    %1255 = vmatprep.subr.mxu0 0.0
    %1256 = vmatpush2.msra.mxu0 0.0
    %1257 = vmatprep.subr.mxu0 0.0
    %1258 = vmatpush2.msra.mxu0 0.0
    %1259 = vmatprep.subr.mxu0 0.0
    %1260 = vmatpush2.msra.mxu0 0.0
    %1261 = vmatprep.subr.mxu0 0.0
    %1262 = vmatpush2.msra.mxu0 0.0
    %1263 = vmatprep.subr.mxu0 0.0
    %1264 = vmatpush2.msra.mxu0 0.0
    %1265 = vmatprep.subr.mxu0 0.0
    %1266 = vmatpush2.msra.mxu0 0.0
    %1267 = vmatprep.subr.mxu0 0.0
    %1268 = vmatpush2.msra.mxu0 0.0
    %1269 = vmatprep.subr.mxu0 0.0
    %1270 = vmatpush2.msra.mxu0 0.0
    %1271 = vmatprep.subr.mxu0 0.0
    %1272 = vmatpush2.msra.mxu0 0.0
    %1273 = vmatprep.subr.mxu0 0.0
    %1274 = vmatpush2.msra.mxu0 0.0
    %1275 = vmatprep.mubr.f32.mxu0 0.0
    %1276 = vmatmul.mubr.f32.gmra.mxu0 %v1209
    %v1277 = vpop.f32.mrf.mxu0
    %v1278 = vadd.f32 0.0, %v1277
    %v1279 = vpop.f32.mrf.mxu0
    %1280 = vdwg.mxu0
    %v1281 = vadd.f32 %v1208, %v1278
    %v1282 = vxor.u32 %v1281, 2147483648
    %v1283 = vmul.f32 %v1282, 1.442695
    %v1284 = vpow.pop %v1283
    %v1285 = vadd.f32 %v1284, 1.0
    %v1286 = vrcp.pop %v1285
    %v1287 = vmul.f32 1.0, %v1286
    %v1288 = vtanh.pop %v1281
    %v1289 = vmul.f32 %v1287, %v1194
    %1291 = vrot.lane.b32.xlu0 %v1288, 32
    %v1292 = vpop.permute.xlu0 %1291
    %v1294 = vmul.f32 %v1287, %v1292
    %1296 = vrot.lane.b32.xlu0 %v1294, 32
    %v1297 = vpop.permute.xlu0 %1296
    %v1299 = vadd.f32 %v1289, %v1297
    %v1300 = vtanh.pop %v1299
    %1302 = vrot.lane.b32.xlu0 %v1300, 32
    %v1303 = vpop.permute.xlu0 %1302
    %v1305 = vmul.f32 %v1287, %v1303
    %1307 = vrot.lane.b32.xlu0 %v1305, 64
    %v1308 = vpop.permute.xlu0 %1307
    %s1310 = scalar_lea.vmem [#allocation3], 48
    %1311 = vst.msk [vmem:[%s1310] sm:$0xff] %vm171, %v1308
    %s1312 = scalar_lea.vmem [#allocation2], 56
    %v1313 = vld [vmem:[%s1312] sm:$0xff]
    %v1314 = vsel %vm171, %v1308, 0
    %1316 = vmatprep.subr.mxu0 0.0
    %1317 = vmatpush1.msra.mxu0 0.0
    %1318 = vmatprep.subr.mxu0 0.0
    %1319 = vmatpush1.msra.mxu0 0.0
    %1320 = vmatprep.subr.mxu0 0.0
    %1321 = vmatpush1.msra.mxu0 0.0
    %1322 = vmatprep.subr.mxu0 0.0
    %1323 = vmatpush1.msra.mxu0 0.0
    %1324 = vmatprep.subr.mxu0 0.0
    %1325 = vmatpush1.msra.mxu0 0.0
    %1326 = vmatprep.subr.mxu0 0.0
    %1327 = vmatpush1.msra.mxu0 0.0
    %1328 = vmatprep.subr.mxu0 0.0
    %1329 = vmatpush1.msra.mxu0 0.0
    %1330 = vmatprep.subr.mxu0 0.0
    %1331 = vmatpush1.msra.mxu0 0.0
    %1332 = vmatprep.subr.mxu0 0.0
    %1333 = vmatpush1.msra.mxu0 0.0
    %1334 = vmatprep.subr.mxu0 0.0
    %1335 = vmatpush1.msra.mxu0 0.0
    %1336 = vmatprep.subr.mxu0 0.0
    %1337 = vmatpush1.msra.mxu0 0.0
    %1338 = vmatprep.subr.mxu0 0.0
    %1339 = vmatpush1.msra.mxu0 0.0
    %1340 = vmatprep.subr.mxu0 0.0
    %1341 = vmatpush1.msra.mxu0 %v572
    %1342 = vmatprep.subr.mxu0 0.0
    %1343 = vmatpush1.msra.mxu0 %v571
    %1344 = vmatprep.subr.mxu0 0.0
    %1345 = vmatpush1.msra.mxu0 %v570
    %1346 = vmatprep.subr.mxu0 0.0
    %1347 = vmatpush1.msra.mxu0 %v569
    %1348 = vmatprep.subr.mxu0 0.0
    %1349 = vmatpush2.msra.mxu0 0.0
    %1350 = vmatprep.subr.mxu0 0.0
    %1351 = vmatpush2.msra.mxu0 0.0
    %1352 = vmatprep.subr.mxu0 0.0
    %1353 = vmatpush2.msra.mxu0 0.0
    %1354 = vmatprep.subr.mxu0 0.0
    %1355 = vmatpush2.msra.mxu0 0.0
    %1356 = vmatprep.subr.mxu0 0.0
    %1357 = vmatpush2.msra.mxu0 0.0
    %1358 = vmatprep.subr.mxu0 0.0
    %1359 = vmatpush2.msra.mxu0 0.0
    %1360 = vmatprep.subr.mxu0 0.0
    %1361 = vmatpush2.msra.mxu0 0.0
    %1362 = vmatprep.subr.mxu0 0.0
    %1363 = vmatpush2.msra.mxu0 0.0
    %1364 = vmatprep.subr.mxu0 0.0
    %1365 = vmatpush2.msra.mxu0 0.0
    %1366 = vmatprep.subr.mxu0 0.0
    %1367 = vmatpush2.msra.mxu0 0.0
    %1368 = vmatprep.subr.mxu0 0.0
    %1369 = vmatpush2.msra.mxu0 0.0
    %1370 = vmatprep.subr.mxu0 0.0
    %1371 = vmatpush2.msra.mxu0 0.0
    %1372 = vmatprep.subr.mxu0 0.0
    %1373 = vmatpush2.msra.mxu0 0.0
    %1374 = vmatprep.subr.mxu0 0.0
    %1375 = vmatpush2.msra.mxu0 0.0
    %1376 = vmatprep.subr.mxu0 0.0
    %1377 = vmatpush2.msra.mxu0 0.0
    %1378 = vmatprep.subr.mxu0 0.0
    %1379 = vmatpush2.msra.mxu0 0.0
    %1380 = vmatprep.mubr.f32.mxu0 0.0
    %1381 = vmatmul.mubr.f32.gmra.mxu0 %v1314
    %v1382 = vpop.f32.mrf.mxu0
    %v1383 = vadd.f32 0.0, %v1382
    %v1384 = vpop.f32.mrf.mxu0
    %1385 = vdwg.mxu0
    %v1386 = vadd.f32 %v1313, %v1383
    %v1387 = vxor.u32 %v1386, 2147483648
    %v1388 = vmul.f32 %v1387, 1.442695
    %v1389 = vpow.pop %v1388
    %v1390 = vadd.f32 %v1389, 1.0
    %v1391 = vrcp.pop %v1390
    %v1392 = vmul.f32 1.0, %v1391
    %v1393 = vtanh.pop %v1386
    %v1394 = vmul.f32 %v1392, %v1299
    %1396 = vrot.lane.b32.xlu0 %v1393, 32
    %v1397 = vpop.permute.xlu0 %1396
    %v1399 = vmul.f32 %v1392, %v1397
    %1401 = vrot.lane.b32.xlu0 %v1399, 32
    %v1402 = vpop.permute.xlu0 %1401
    %v1404 = vadd.f32 %v1394, %v1402
    %v1405 = vtanh.pop %v1404
    %1407 = vrot.lane.b32.xlu0 %v1405, 32
    %v1408 = vpop.permute.xlu0 %1407
    %v1410 = vmul.f32 %v1392, %v1408
    %1412 = vrot.lane.b32.xlu0 %v1410, 64
    %v1413 = vpop.permute.xlu0 %1412
    %s1415 = scalar_lea.vmem [#allocation3], 56
    %1416 = vst.msk [vmem:[%s1415] sm:$0xff] %vm171, %v1413
    %1418 = vrot.lane.b32.xlu0 %v1404, 96
    %v1419 = vpop.permute.xlu0 %1418
    %1421 = vst.msk [vmem:[#allocation21] sm:$0xff] %vm171, %v1419
    %v1422 = vld [vmem:[#allocation3] sm:$0xff]
    %v1423 = vld [vmem:[#allocation3 + $0x8] sm:$0xff]
    %v1424 = vld [vmem:[#allocation3 + $0x10] sm:$0xff]
    %v1425 = vld [vmem:[#allocation3 + $0x18] sm:$0xff]
    %v1426 = vld [vmem:[#allocation3 + $0x20] sm:$0xff]
    %v1427 = vld [vmem:[#allocation3 + $0x28] sm:$0xff]
    %v1428 = vld [vmem:[#allocation3 + $0x30] sm:$0xff]
    %v1429 = vld [vmem:[#allocation3 + $0x38] sm:$0xff]
    %1430 = vst.msk [vmem:[#allocation18] sm:$0xff] %vm171, %v1422
    %1431 = vst.msk [vmem:[#allocation18 + $0x8] sm:$0xff] %vm171, %v1423
    %1432 = vst.msk [vmem:[#allocation18 + $0x10] sm:$0xff] %vm171, %v1424
    %1433 = vst.msk [vmem:[#allocation18 + $0x18] sm:$0xff] %vm171, %v1425
    %1434 = vst.msk [vmem:[#allocation18 + $0x20] sm:$0xff] %vm171, %v1426
    %1435 = vst.msk [vmem:[#allocation18 + $0x28] sm:$0xff] %vm171, %v1427
    %1436 = vst.msk [vmem:[#allocation18 + $0x30] sm:$0xff] %vm171, %v1428
    %1437 = vst.msk [vmem:[#allocation18 + $0x38] sm:$0xff] %vm171, %v1429
    %v1438 = vld [vmem:[#allocation3] sm:$0xff]
    %v1439 = vld [vmem:[#allocation3 + $0x8] sm:$0xff]
    %v1440 = vld [vmem:[#allocation3 + $0x10] sm:$0xff]
    %v1441 = vld [vmem:[#allocation3 + $0x18] sm:$0xff]
    %v1442 = vld [vmem:[#allocation3 + $0x20] sm:$0xff]
    %v1443 = vld [vmem:[#allocation3 + $0x28] sm:$0xff]
    %v1444 = vld [vmem:[#allocation3 + $0x30] sm:$0xff]
    %v1445 = vld [vmem:[#allocation3 + $0x38] sm:$0xff]
    %v1446 = vpack.c.bf16 %v1439, %v1438
    %v1447 = vpack.c.bf16 %v1441, %v1440
    %v1448 = vpack.c.bf16 %v1443, %v1442
    %v1449 = vpack.c.bf16 %v1445, %v1444
    %v1450 = vld [vmem:[%s11] sm:$0xf]
    %v1451 = vld [vmem:[%s11 + $0x4] sm:$0xf]
    %v1452 = vld [vmem:[%s11 + $0x8] sm:$0xf]
    %v1453 = vld [vmem:[%s11 + $0xc] sm:$0xf]
    %v1458 = vunpack.c.l.b16 %v1450
    %v1459 = vunpack.c.l.b16 %v1451
    %v1460 = vunpack.c.l.b16 %v1452
    %v1461 = vunpack.c.l.b16 %v1453
    %v1462 = vpack.c.b16 %v1459, %v1458
    %v1463 = vpack.c.b16 %v1461, %v1460
    %v1467 = vsel %vm171, %v1446, 0
    %v1470 = vsel %vm171, %v1447, 0
    %v1473 = vsel %vm171, %v1448, 0
    %v1476 = vsel %vm171, %v1449, 0
    %1478 = vmatprep.subr.bf16.mxu0 0
    %1479 = vmatpush1.bf16.msra.mxu0 0
    %1480 = vmatprep.subr.bf16.mxu0 0
    %1481 = vmatpush1.bf16.msra.mxu0 0
    %1482 = vmatprep.subr.bf16.mxu0 0
    %1483 = vmatpush1.bf16.msra.mxu0 0
    %1484 = vmatprep.subr.bf16.mxu0 0
    %1485 = vmatpush1.bf16.msra.mxu0 0
    %1486 = vmatprep.subr.bf16.mxu0 0
    %1487 = vmatpush1.bf16.msra.mxu0 0
    %1488 = vmatprep.subr.bf16.mxu0 0
    %1489 = vmatpush1.bf16.msra.mxu0 0
    %1490 = vmatprep.subr.bf16.mxu0 0
    %1491 = vmatpush1.bf16.msra.mxu0 %v1463
    %1492 = vmatprep.subr.bf16.mxu0 0
    %1493 = vmatpush1.bf16.msra.mxu0 %v1462
    %1494 = vmatprep.subr.bf16.mxu0 0
    %1495 = vmatpush2.bf16.msra.mxu0 0
    %1496 = vmatprep.subr.bf16.mxu0 0
    %1497 = vmatpush2.bf16.msra.mxu0 0
    %1498 = vmatprep.subr.bf16.mxu0 0
    %1499 = vmatpush2.bf16.msra.mxu0 0
    %1500 = vmatprep.subr.bf16.mxu0 0
    %1501 = vmatpush2.bf16.msra.mxu0 0
    %1502 = vmatprep.subr.bf16.mxu0 0
    %1503 = vmatpush2.bf16.msra.mxu0 0
    %1504 = vmatprep.subr.bf16.mxu0 0
    %1505 = vmatpush2.bf16.msra.mxu0 0
    %1506 = vmatprep.subr.bf16.mxu0 0
    %1507 = vmatpush2.bf16.msra.mxu0 0
    %1508 = vmatprep.subr.bf16.mxu0 0
    %1509 = vmatpush2.bf16.msra.mxu0 0
    %1510 = vmatprep.mubr.bf16.mxu0 0
    %1511 = vmatmul.mubr.bf16.gmra.mxu0 %v1467
    %v1512 = vpop.f32.mrf.mxu0
    %v1513 = vadd.f32 0.0, %v1512
    %v1514 = vpop.f32.mrf.mxu0
    %v1515 = vpop.f32.mrf.mxu0
    %v1516 = vadd.f32 0.0, %v1515
    %v1517 = vpop.f32.mrf.mxu0
    %1518 = vmatprep.mubr.bf16.mxu0 0
    %1519 = vmatmul.mubr.bf16.gmra.mxu0 %v1470
    %v1520 = vpop.f32.mrf.mxu0
    %v1521 = vadd.f32 0.0, %v1520
    %v1522 = vpop.f32.mrf.mxu0
    %v1523 = vpop.f32.mrf.mxu0
    %v1524 = vadd.f32 0.0, %v1523
    %v1525 = vpop.f32.mrf.mxu0
    %1526 = vmatprep.mubr.bf16.mxu0 0
    %1527 = vmatmul.mubr.bf16.gmra.mxu0 %v1473
    %v1528 = vpop.f32.mrf.mxu0
    %v1529 = vadd.f32 0.0, %v1528
    %v1530 = vpop.f32.mrf.mxu0
    %v1531 = vpop.f32.mrf.mxu0
    %v1532 = vadd.f32 0.0, %v1531
    %v1533 = vpop.f32.mrf.mxu0
    %1534 = vmatprep.mubr.bf16.mxu0 0
    %1535 = vmatmul.mubr.bf16.gmra.mxu0 %v1476
    %v1536 = vpop.f32.mrf.mxu0
    %v1537 = vadd.f32 0.0, %v1536
    %v1538 = vpop.f32.mrf.mxu0
    %v1539 = vpop.f32.mrf.mxu0
    %v1540 = vadd.f32 0.0, %v1539
    %v1541 = vpop.f32.mrf.mxu0
    %1542 = vdwg.mxu0
    %1543 = vst [vmem:[#allocation22] sm:$0xff] %v1513
    %1544 = vst [vmem:[#allocation22 + $0x8] sm:$0xff] %v1516
    %1545 = vst [vmem:[#allocation22 + $0x10] sm:$0xff] %v1521
    %1546 = vst [vmem:[#allocation22 + $0x18] sm:$0xff] %v1524
    %1547 = vst [vmem:[#allocation22 + $0x20] sm:$0xff] %v1529
    %1548 = vst [vmem:[#allocation22 + $0x28] sm:$0xff] %v1532
    %1549 = vst [vmem:[#allocation22 + $0x30] sm:$0xff] %v1537
    %1550 = vst [vmem:[#allocation22 + $0x38] sm:$0xff] %v1540
    // Predicated region
    $region82: #{tpu_custom_call.1} parent=1 // pred_check
      _
    $region83: #{tpu_custom_call.1} parent=1 // pred_check_branch
      %1552 = sbr.rel (0) target = $region85
    $region84: #{tpu_custom_call.1} parent=1 // pred_region
      %s1554 = ssub.s32 1024, 1024
      %1555 = vsyncadd [#allocation6], %s1554
      %s1556 = sshll.u32 [#allocation18], 4
      %s1557 = int_to_ptr.vmem [resolvable:$true] %s1556
      %1562 = dma.vmem_to_hbm [thread:$0]  %s1557, 1024, %s12, [#allocation6], 128, 128, 8
    $region85: #{tpu_custom_call.1} parent=1 // pred_fallthru
      _
    // Predicated region
    $region86: #{tpu_custom_call.1} parent=1 // pred_check
      _
    $region87: #{tpu_custom_call.1} parent=1 // pred_check_branch
      %1564 = sbr.rel (0) target = $region89
    $region88: #{tpu_custom_call.1} parent=1 // pred_region
      %s1566 = ssub.s32 128, 128
      %1567 = vsyncadd [#allocation20], %s1566
      %s1569 = sshll.u32 [#allocation19], 4
      %s1570 = int_to_ptr.vmem [resolvable:$true] %s1569
      %1572 = dma.vmem_to_hbm [thread:$0]  %s1570, 128, %s13, [#allocation20]
    $region89: #{tpu_custom_call.1} parent=1 // pred_fallthru
      _
    // Predicated region
    $region90: #{tpu_custom_call.1} parent=1 // pred_check
      _
    $region91: #{tpu_custom_call.1} parent=1 // pred_check_branch
      %1574 = sbr.rel (0) target = $region93
    $region92: #{tpu_custom_call.1} parent=1 // pred_region
      %s1576 = ssub.s32 128, 128
      %1577 = vsyncadd [#allocation20], %s1576
      %s1579 = sshll.u32 [#allocation21], 4
      %s1580 = int_to_ptr.vmem [resolvable:$true] %s1579
      %1582 = dma.vmem_to_hbm [thread:$0]  %s1580, 128, %s14, [#allocation20]
    $region93: #{tpu_custom_call.1} parent=1 // pred_fallthru
      _
    // Predicated region
    $region94: #{tpu_custom_call.1} parent=1 // pred_check
      _
    $region95: #{tpu_custom_call.1} parent=1 // pred_check_branch
      %1584 = sbr.rel (0) target = $region97
    $region96: #{tpu_custom_call.1} parent=1 // pred_region
      %s1586 = ssub.s32 1024, 1024
      %1587 = vsyncadd [#allocation23], %s1586
      %s1588 = sshll.u32 [#allocation22], 4
      %s1589 = int_to_ptr.vmem [resolvable:$true] %s1588
      %1594 = dma.vmem_to_hbm [thread:$0]  %s1589, 1024, %s15, [#allocation23], 128, 128, 8
    $region97: #{tpu_custom_call.1} parent=1 // pred_fallthru
      _
    // Predicated region
    $region98: #{tpu_custom_call.1} parent=1 // pred_check
      _
    $region99: #{tpu_custom_call.1} parent=1 // pred_check_branch
      %1596 = sbr.rel (0) target = $region101
    $region100: #{tpu_custom_call.1} parent=1 // pred_region
      %1597 = dma.done [#allocation6], 1024
    $region101: #{tpu_custom_call.1} parent=1 // pred_fallthru
      _
    // Predicated region
    $region102: #{tpu_custom_call.1} parent=1 // pred_check
      _
    $region103: #{tpu_custom_call.1} parent=1 // pred_check_branch
      %1599 = sbr.rel (0) target = $region105
    $region104: #{tpu_custom_call.1} parent=1 // pred_region
      %1600 = dma.done [#allocation20], 128
    $region105: #{tpu_custom_call.1} parent=1 // pred_fallthru
      _
    // Predicated region
    $region106: #{tpu_custom_call.1} parent=1 // pred_check
      _
    $region107: #{tpu_custom_call.1} parent=1 // pred_check_branch
      %1602 = sbr.rel (0) target = $region109
    $region108: #{tpu_custom_call.1} parent=1 // pred_region
      %1603 = dma.done [#allocation20], 128
    $region109: #{tpu_custom_call.1} parent=1 // pred_fallthru
      _
    // Predicated region
    $region110: #{tpu_custom_call.1} parent=1 // pred_check
      _
    $region111: #{tpu_custom_call.1} parent=1 // pred_check_branch
      %1605 = sbr.rel (0) target = $region113
    $region112: #{tpu_custom_call.1} parent=1 // pred_region
      %1606 = dma.done [#allocation23], 1024
    $region113: #{tpu_custom_call.1} parent=1 // pred_fallthru
      _
    %1607 = vsyncpa [#allocation5], 1
    %1608 = vsyncpa [#allocation8], 1
    %1609 = vsyncpa [#allocation11], 1
    %1610 = vsyncpa [#allocation14], 1
    %1611 = vsyncpa [#allocation17], 1
    %1612 = vsyncpa [#allocation6], 1
    %1613 = vsyncpa [#allocation20], 1
    %1614 = vsyncpa [#allocation23], 1

</llo_original>
